<compile_context>
chip_gen: v7x
topology: tpu7x:2x2x1
jax: 0.10.0
libtpu: 0.0.40
codegen_flags: <defaults>
</compile_context>

<pallas_src>
import jax
import jax.numpy as jnp
import numpy as np
from jax.experimental import pallas as pl
from jax.experimental.pallas import tpu as pltpu


# ---------------------------------------------------------------------------
# Pass 1: fused maxpool + 3x3 folded-complex conv (9 accumulating MXU dots)
#         + bias + per-block BatchNorm partial statistics.
# ---------------------------------------------------------------------------
def pool_conv_stats_kernel(x_ref, w_ref, b_ref, y_ref, stats_ref):
    # x_ref:     (gt, Ht+2, Wp+2, 4*Cin2) f32   space-to-depth input with zero halo
    # w_ref:     (9*Cin2, Cpad)           bf16  im2col-ordered folded conv weights
    # b_ref:     (1, Cpad)                f32   folded bias (zero channel padding)
    # y_ref:     (gt, Ht, Wp, Cout2)      bf16  conv + bias (pre-BN), channel-unpadded
    # stats_ref: (1, 2, Cpad)             f32   row0 = sum, row1 = sum of squares
    gt, Htp, Wpp, C4 = x_ref.shape
    Ht, Wp = Htp - 2, Wpp - 2
    Cin2 = C4 // 4
    Cout2 = y_ref.shape[-1]
    Cpad = w_ref.shape[-1]
    M = gt * Ht * Wp

    x = x_ref[...]
    # 2x2 max pool: the pool window was folded into 4 channel groups by the wrapper
    # (space-to-depth), so this is pure VPU max over static lane slices, in f32.
    pooled = jnp.maximum(
        jnp.maximum(x[..., 0 * Cin2:1 * Cin2], x[..., 1 * Cin2:2 * Cin2]),
        jnp.maximum(x[..., 2 * Cin2:3 * Cin2], x[..., 3 * Cin2:4 * Cin2]),
    )  # (gt, Ht+2, Wp+2, Cin2); zero halo ring == the conv's zero padding
    pooled = pooled.astype(jnp.bfloat16)        # explicit bf16 MXU operand

    # 3x3 conv as 9 accumulating MXU dots (no im2col scratch, no store/reload).
    acc = jnp.zeros((M, Cpad), jnp.float32)
    for t in range(9):
        dh, dw = t // 3, t % 3
        tap = pooled[:, dh:dh + Ht, dw:dw + Wp, :].reshape(M, Cin2)
        acc = acc + jnp.dot(tap, w_ref[t * Cin2:(t + 1) * Cin2, :],
                            preferred_element_type=jnp.float32)
    acc = acc + b_ref[...]

    # Per-block BatchNorm partial statistics, taken from the f32 accumulator so the
    # bf16 output rounding below does not perturb them (finalized in the wrapper).
    stats_ref[0, 0:1, :] = jnp.sum(acc, axis=0, keepdims=True)
    stats_ref[0, 1:2, :] = jnp.sum(acc * acc, axis=0, keepdims=True)

    # Store the pre-BN activations unpadded (only Cout2 channels) and in bf16 — this
    # tensor is what both passes stream through HBM.
    y_ref[...] = acc[:, :Cout2].astype(jnp.bfloat16).reshape(gt, Ht, Wp, Cout2)


# ---------------------------------------------------------------------------
# Pass 2: per-channel scale/shift (precomputed BatchNorm) + ReLU, streaming.
# ---------------------------------------------------------------------------
def bn_relu_kernel(y_ref, scale_ref, shift_ref, o_ref):
    # y_ref: (gt2, Ht, Wp, Cout2) bf16 ; scale/shift: (1, Cout2) f32
    scale = scale_ref[...].reshape(1, 1, 1, -1)
    shift = shift_ref[...].reshape(1, 1, 1, -1)
    o_ref[...] = jnp.maximum(y_ref[...].astype(jnp.float32) * scale + shift, 0.0)


# ---------------------------------------------------------------------------
# Tile planning (VMEM-budgeted, v7x-safe) and wrapper
# ---------------------------------------------------------------------------
_PLAN_BUDGET = 20 << 20      # per-step working-set target (well under v7x's 64 MiB)


def _divisors(n):
    return [d for d in range(1, n + 1) if n % d == 0]


def _round_up(x, m):
    return ((x + m - 1) // m) * m


def _pass1_step_bytes(gt, Ht, Wp, Cin2, Cout2, Cpad):
    xb = gt * (Ht + 2) * (Wp + 2) * 4 * Cin2 * 4         # f32 input block
    yb = gt * Ht * Wp * Cout2 * 2                        # bf16 output block
    wb = 9 * Cin2 * Cpad * 2                             # bf16 folded weights
    sb = 2 * Cpad * 4                                    # BN partial sums
    # pipeline blocks are double-buffered; add resident compute values
    # (pooled f32 + bf16 copy + f32 matmul accumulator)
    vals = xb // 4 + xb // 8 + gt * Ht * Wp * Cpad * 4
    return 2 * (xb + yb + wb + sb) + vals


def _plan_pass1(N, Hp, Wp, Cin2, Cout2, Cpad, budget=_PLAN_BUDGET):
    # Smallest height split whose single-tile step fits the budget (spatial tiling
    # bounds per-step VMEM independent of image size).
    n_ht = Hp
    for d in _divisors(Hp):
        if _pass1_step_bytes(1, Hp // d, Wp, Cin2, Cout2, Cpad) <= budget:
            n_ht = d
            break
    # Guarantee >= 2 grid steps when possible (v7x megacore sharding).
    if N * n_ht < 2 and Hp >= 2:
        n_ht = next(d for d in _divisors(Hp) if d >= 2)
    Ht = Hp // n_ht
    NT = N * n_ht
    # Largest leading block that fits the budget and still leaves >= 2 grid steps.
    gt = 1
    for d in _divisors(NT):
        if (_pass1_step_bytes(d, Ht, Wp, Cin2, Cout2, Cpad) <= budget
                and (NT // d >= 2 or NT == 1)):
            gt = d
    return n_ht, Ht, NT, gt, _pass1_step_bytes(gt, Ht, Wp, Cin2, Cout2, Cpad)


def _pass2_step_bytes(gt2, Ht, Wp, Cout2):
    blk = gt2 * Ht * Wp * Cout2
    return 2 * (blk * 2 + blk * 4) + 4 * Cout2 * 4       # bf16 in + f32 out, x2 buffers


def _plan_pass2(NT, Ht, Wp, Cout2, budget=_PLAN_BUDGET):
    gt2 = 1
    for d in _divisors(NT):
        if (_pass2_step_bytes(d, Ht, Wp, Cout2) <= budget
                and (NT // d >= 2 or NT == 1)):
            gt2 = d
    return gt2, _pass2_step_bytes(gt2, Ht, Wp, Cout2)


def _vmem_limit(need_bytes):
    # Explicit scoped-VMEM budget (defaults: 16 MiB v5e / 32 MiB v6e,v7x). Planned
    # blocks stay well under 48 MiB, so the 40 MiB floor is v7x-safe; the high cap
    # only matters for pathological fallback shapes on v5e/v6e.
    return int(min(max(need_bytes * 5 // 4, 40 << 20), 120 << 20))


def complex_down_conv_block(x, w_re, b_re, w_im, b_im, gamma, beta):
    """x: (N, 2, C_in, H, W) float32.  Returns (N, 2, C_out, H//2, W//2) float32."""
    N, two, C_in, H, W = x.shape
    assert two == 2 and H % 2 == 0 and W % 2 == 0
    C_out = w_re.shape[0]
    Hp, Wp = H // 2, W // 2
    Cin2, Cout2 = 2 * C_in, 2 * C_out
    Cpad = _round_up(Cout2, 128)      # lane-dense MXU output; padding never hits HBM

    # ---- fold the complex conv into one real conv: 2*C_in -> 2*C_out ----
    #   real outputs use [ W_re, -W_im ] over [x_re, x_im]; imag use [ W_im, W_re ]
    w_top = jnp.concatenate([w_re, -w_im], axis=1)            # (C_out, Cin2, 3, 3)
    w_bot = jnp.concatenate([w_im, w_re], axis=1)
    w_big = jnp.concatenate([w_top, w_bot], axis=0)           # (Cout2, Cin2, 3, 3)
    b_big = jnp.concatenate([b_re - b_im, b_re + b_im], 0)    # (Cout2,)

    # im2col weight layout: row index = (kh*3 + kw)*Cin2 + cin ; bf16 MXU operand.
    w_k = jnp.transpose(w_big, (2, 3, 1, 0)).reshape(9 * Cin2, Cout2)
    w_k = jnp.pad(w_k, ((0, 0), (0, Cpad - Cout2))).astype(jnp.bfloat16)
    b_k = jnp.pad(b_big, (0, Cpad - Cout2)).reshape(1, Cpad).astype(jnp.float32)

    # ---- layout plumbing (no compute): space-to-depth so the 2x2 pool window lives
    # in the channel/lane dim, plus a zero spatial halo ring (maxpool over injected
    # zeros == 0 == the conv's zero padding). ----
    xs = x.reshape(N, Cin2, Hp, 2, Wp, 2)
    xs = jnp.transpose(xs, (0, 2, 4, 3, 5, 1)).reshape(N, Hp, Wp, 4 * Cin2)
    xs = jnp.pad(xs, ((0, 0), (1, 1), (1, 1), (0, 0)))        # (N, Hp+2, Wp+2, 4*Cin2)

    # ---- batch x height tiling plan ----
    n_ht, Ht, NT, gt, need1 = _plan_pass1(N, Hp, Wp, Cin2, Cout2, Cpad)
    if n_ht == 1:
        xs_t = xs
    else:
        # Replicate the 1-row halo between height tiles (2 extra rows per tile).
        xs_t = jnp.stack([xs[:, t * Ht:t * Ht + Ht + 2] for t in range(n_ht)], axis=1)
        xs_t = xs_t.reshape(N * n_ht, Ht + 2, Wp + 2, 4 * Cin2)
    nb1 = NT // gt

    y, stats = pl.pallas_call(
        pool_conv_stats_kernel,
        out_shape=(
            jax.ShapeDtypeStruct((NT, Ht, Wp, Cout2), jnp.bfloat16),
            jax.ShapeDtypeStruct((nb1, 2, Cpad), jnp.float32),
        ),
        grid=(nb1,),
        in_specs=[
            pl.BlockSpec((gt, Ht + 2, Wp + 2, 4 * Cin2), lambda n: (n, 0, 0, 0)),
            pl.BlockSpec((9 * Cin2, Cpad), lambda n: (0, 0)),
            pl.BlockSpec((1, Cpad), lambda n: (0, 0)),
        ],
        out_specs=(
            pl.BlockSpec((gt, Ht, Wp, Cout2), lambda n: (n, 0, 0, 0)),
            pl.BlockSpec((1, 2, Cpad), lambda n: (n, 0, 0)),
        ),
        compiler_params=pltpu.CompilerParams(
            dimension_semantics=("parallel",),
            vmem_limit_bytes=_vmem_limit(need1)),
    )(xs_t, w_k, b_k)

    # ---- finalize BatchNorm statistics ONCE in plain JAX (tiny); pass 2 gets only
    # a per-channel scale/shift. ----
    count = float(N * Hp * Wp)
    st = jnp.sum(stats, axis=0)                         # (2, Cpad)
    mean = st[0, :Cout2] / count
    var = st[1, :Cout2] / count - mean * mean           # biased var (training BN)
    inv_std = jax.lax.rsqrt(var + 1e-5)
    scale = (gamma * inv_std).reshape(1, Cout2).astype(jnp.float32)
    shift = (beta - mean * gamma * inv_std).reshape(1, Cout2).astype(jnp.float32)

    gt2, need2 = _plan_pass2(NT, Ht, Wp, Cout2)
    nb2 = NT // gt2
    out_nhwc = pl.pallas_call(
        bn_relu_kernel,
        out_shape=jax.ShapeDtypeStruct((NT, Ht, Wp, Cout2), jnp.float32),
        grid=(nb2,),
        in_specs=[
            pl.BlockSpec((gt2, Ht, Wp, Cout2), lambda n: (n, 0, 0, 0)),
            pl.BlockSpec((1, Cout2), lambda n: (0, 0)),
            pl.BlockSpec((1, Cout2), lambda n: (0, 0)),
        ],
        out_specs=pl.BlockSpec((gt2, Ht, Wp, Cout2), lambda n: (n, 0, 0, 0)),
        compiler_params=pltpu.CompilerParams(
            dimension_semantics=("parallel",),
            vmem_limit_bytes=_vmem_limit(need2)),
    )(y, scale, shift)

    # NHWC (unpadded channels) -> (N, 2, C_out, Hp, Wp); the transpose runs on the
    # small unpadded tensor.
    out = out_nhwc.reshape(N, Hp, Wp, Cout2)
    out = jnp.transpose(out, (0, 3, 1, 2))
    return out.reshape(N, 2, C_out, Hp, Wp)


# ---------------------------------------------------------------------------
# Pure-JAX reference (high-precision, for sanity check)
# ---------------------------------------------------------------------------
def reference(x, w_re, b_re, w_im, b_im, gamma, beta):
    N, _, C_in, H, W = x.shape
    xr = x.reshape(N, 2 * C_in, H, W)
    xp = jax.lax.reduce_window(xr, -jnp.inf, jax.lax.max,
                               (1, 1, 2, 2), (1, 1, 2, 2), "VALID")
    x_re, x_im = xp[:, :C_in], xp[:, C_in:]

    def conv(inp, w, b):
        out = jax.lax.conv_general_dilated(
            inp, w, (1, 1), ((1, 1), (1, 1)),
            dimension_numbers=("NCHW", "OIHW", "NCHW"),
            precision=jax.lax.Precision.HIGHEST)
        return out + b[None, :, None, None]

    real = conv(x_re, w_re, b_re) - conv(x_im, w_im, b_im)
    imag = conv(x_im, w_re, b_re) + conv(x_re, w_im, b_im)
    y = jnp.concatenate([real, imag], axis=1)                 # (N, 2*C_out, Hp, Wp)
    mean = y.mean(axis=(0, 2, 3), keepdims=True)
    var = ((y - mean) ** 2).mean(axis=(0, 2, 3), keepdims=True)
    y = (y - mean) / jnp.sqrt(var + 1e-5)
    y = y * gamma[None, :, None, None] + beta[None, :, None, None]
    y = jnp.maximum(y, 0.0)
    return y.reshape(N, 2, -1, H // 2, W // 2)


if __name__ == "__main__":
    key = jax.random.PRNGKey(0)
    N, C_in, C_out, H, W = 2, 4, 8, 16, 16

    k_x, k_wr, k_br, k_wi, k_bi = jax.random.split(key, 5)
    x = jax.random.normal(k_x, (N, 2, C_in, H, W), jnp.float32)

    # Deterministic parameter init (PyTorch-like uniform bound = 1/sqrt(fan_in*k*k))
    bound = 1.0 / np.sqrt(C_in * 3 * 3)
    w_re = jax.random.uniform(k_wr, (C_out, C_in, 3, 3), jnp.float32, -bound, bound)
    b_re = jax.random.uniform(k_br, (C_out,), jnp.float32, -bound, bound)
    w_im = jax.random.uniform(k_wi, (C_out, C_in, 3, 3), jnp.float32, -bound, bound)
    b_im = jax.random.uniform(k_bi, (C_out,), jnp.float32, -bound, bound)
    gamma = jnp.ones((2 * C_out,), jnp.float32)   # BatchNorm2d weight
    beta = jnp.zeros((2 * C_out,), jnp.float32)   # BatchNorm2d bias

    out = complex_down_conv_block(x, w_re, b_re, w_im, b_im, gamma, beta)
    out = jax.block_until_ready(out)

    ref = reference(x, w_re, b_re, w_im, b_im, gamma, beta)
    assert out.shape == (N, 2, C_out, H // 2, W // 2), out.shape
    # Tolerance reflects the explicit bf16 MXU operands + bf16 pre-BN intermediate
    # (f32 accumulation, f32 BN statistics) vs the HIGHEST-precision f32 reference.
    np.testing.assert_allclose(np.asarray(out), np.asarray(ref), rtol=5e-2, atol=5e-2)

    print("KERNEL_OK")
</pallas_src>

<mosaic_0001>
module attributes {stable_mosaic.version = 11 : i64} {
  func.func @pool_conv_stats_kernel(%arg0: i32, %arg1: memref<1x10x10x32xf32, #tpu.memory_space<vmem>>, %arg2: memref<72x128xbf16, #tpu.memory_space<vmem>>, %arg3: memref<1x128xf32, #tpu.memory_space<vmem>>, %arg4: memref<1x8x8x16xbf16, #tpu.memory_space<vmem>>, %arg5: memref<1x2x128xf32, #tpu.memory_space<vmem>>) attributes {dimension_semantics = [#tpu.dimension_semantics<parallel>], iteration_bounds = array<i64: 2>, scalar_prefetch = 0 : i64, scratch_operands = 0 : i64, tpu.core_type = #tpu.core_type<tc>, window_params = [{transform_indices = @transform_0, window_bounds = array<i64: 1, 10, 10, 32>}, {pipeline_mode = #tpu.pipeline_mode<synchronous>, transform_indices = @transform_1, window_bounds = array<i64: 72, 128>}, {pipeline_mode = #tpu.pipeline_mode<synchronous>, transform_indices = @transform_2, window_bounds = array<i64: 1, 128>}, {transform_indices = @transform_3, window_bounds = array<i64: 1, 8, 8, 16>}, {transform_indices = @transform_4, window_bounds = array<i64: 1, 2, 128>}]} {
    %c0 = arith.constant 0 : index
    %c0_0 = arith.constant 0 : index
    %c0_1 = arith.constant 0 : index
    %c0_2 = arith.constant 0 : index
    %0 = vector.load %arg1[%c0, %c0_0, %c0_1, %c0_2] : memref<1x10x10x32xf32, #tpu.memory_space<vmem>>, vector<1x10x10x32xf32>
    %1 = vector.extract_strided_slice %0 {offsets = [0, 0, 0, 0], sizes = [1, 10, 10, 8], strides = [1, 1, 1, 1]} : vector<1x10x10x32xf32> to vector<1x10x10x8xf32>
    %2 = vector.extract_strided_slice %0 {offsets = [0, 0, 0, 8], sizes = [1, 10, 10, 8], strides = [1, 1, 1, 1]} : vector<1x10x10x32xf32> to vector<1x10x10x8xf32>
    %3 = arith.maximumf %1, %2 : vector<1x10x10x8xf32>
    %4 = vector.extract_strided_slice %0 {offsets = [0, 0, 0, 16], sizes = [1, 10, 10, 8], strides = [1, 1, 1, 1]} : vector<1x10x10x32xf32> to vector<1x10x10x8xf32>
    %5 = vector.extract_strided_slice %0 {offsets = [0, 0, 0, 24], sizes = [1, 10, 10, 8], strides = [1, 1, 1, 1]} : vector<1x10x10x32xf32> to vector<1x10x10x8xf32>
    %6 = arith.maximumf %4, %5 : vector<1x10x10x8xf32>
    %7 = arith.maximumf %3, %6 : vector<1x10x10x8xf32>
    %8 = arith.truncf %7 : vector<1x10x10x8xf32> to vector<1x10x10x8xbf16>
    %cst = arith.constant 0.000000e+00 : f32
    %9 = vector.broadcast %cst : f32 to vector<64x128xf32>
    %10 = vector.extract_strided_slice %8 {offsets = [0, 0, 0, 0], sizes = [1, 8, 8, 8], strides = [1, 1, 1, 1]} : vector<1x10x10x8xbf16> to vector<1x8x8x8xbf16>
    %11 = vector.shape_cast %10 : vector<1x8x8x8xbf16> to vector<64x8xbf16>
    %c0_3 = arith.constant 0 : index
    %c0_4 = arith.constant 0 : index
    %12 = vector.load %arg2[%c0_3, %c0_4] : memref<72x128xbf16, #tpu.memory_space<vmem>>, vector<8x128xbf16>
    %cst_5 = arith.constant dense<0.000000e+00> : vector<64x128xf32>
    %13 = tpu.matmul %11, %12, %cst_5 {dimension_numbers = #tpu.dot_dimension_numbers<[1], [0], [0], [1], [0, 0, 1, 1], [], []>} : vector<64x8xbf16>, vector<8x128xbf16>, vector<64x128xf32> -> vector<64x128xf32>
    %14 = arith.addf %9, %13 : vector<64x128xf32>
    %15 = vector.extract_strided_slice %8 {offsets = [0, 0, 1, 0], sizes = [1, 8, 8, 8], strides = [1, 1, 1, 1]} : vector<1x10x10x8xbf16> to vector<1x8x8x8xbf16>
    %16 = vector.shape_cast %15 : vector<1x8x8x8xbf16> to vector<64x8xbf16>
    %c8 = arith.constant 8 : index
    %c0_6 = arith.constant 0 : index
    %17 = vector.load %arg2[%c8, %c0_6] : memref<72x128xbf16, #tpu.memory_space<vmem>>, vector<8x128xbf16>
    %cst_7 = arith.constant dense<0.000000e+00> : vector<64x128xf32>
    %18 = tpu.matmul %16, %17, %cst_7 {dimension_numbers = #tpu.dot_dimension_numbers<[1], [0], [0], [1], [0, 0, 1, 1], [], []>} : vector<64x8xbf16>, vector<8x128xbf16>, vector<64x128xf32> -> vector<64x128xf32>
    %19 = arith.addf %14, %18 : vector<64x128xf32>
    %20 = vector.extract_strided_slice %8 {offsets = [0, 0, 2, 0], sizes = [1, 8, 8, 8], strides = [1, 1, 1, 1]} : vector<1x10x10x8xbf16> to vector<1x8x8x8xbf16>
    %21 = vector.shape_cast %20 : vector<1x8x8x8xbf16> to vector<64x8xbf16>
    %c16 = arith.constant 16 : index
    %c0_8 = arith.constant 0 : index
    %22 = vector.load %arg2[%c16, %c0_8] : memref<72x128xbf16, #tpu.memory_space<vmem>>, vector<8x128xbf16>
    %cst_9 = arith.constant dense<0.000000e+00> : vector<64x128xf32>
    %23 = tpu.matmul %21, %22, %cst_9 {dimension_numbers = #tpu.dot_dimension_numbers<[1], [0], [0], [1], [0, 0, 1, 1], [], []>} : vector<64x8xbf16>, vector<8x128xbf16>, vector<64x128xf32> -> vector<64x128xf32>
    %24 = arith.addf %19, %23 : vector<64x128xf32>
    %25 = vector.extract_strided_slice %8 {offsets = [0, 1, 0, 0], sizes = [1, 8, 8, 8], strides = [1, 1, 1, 1]} : vector<1x10x10x8xbf16> to vector<1x8x8x8xbf16>
    %26 = vector.shape_cast %25 : vector<1x8x8x8xbf16> to vector<64x8xbf16>
    %c24 = arith.constant 24 : index
    %c0_10 = arith.constant 0 : index
    %27 = vector.load %arg2[%c24, %c0_10] : memref<72x128xbf16, #tpu.memory_space<vmem>>, vector<8x128xbf16>
    %cst_11 = arith.constant dense<0.000000e+00> : vector<64x128xf32>
    %28 = tpu.matmul %26, %27, %cst_11 {dimension_numbers = #tpu.dot_dimension_numbers<[1], [0], [0], [1], [0, 0, 1, 1], [], []>} : vector<64x8xbf16>, vector<8x128xbf16>, vector<64x128xf32> -> vector<64x128xf32>
    %29 = arith.addf %24, %28 : vector<64x128xf32>
    %30 = vector.extract_strided_slice %8 {offsets = [0, 1, 1, 0], sizes = [1, 8, 8, 8], strides = [1, 1, 1, 1]} : vector<1x10x10x8xbf16> to vector<1x8x8x8xbf16>
    %31 = vector.shape_cast %30 : vector<1x8x8x8xbf16> to vector<64x8xbf16>
    %c32 = arith.constant 32 : index
    %c0_12 = arith.constant 0 : index
    %32 = vector.load %arg2[%c32, %c0_12] : memref<72x128xbf16, #tpu.memory_space<vmem>>, vector<8x128xbf16>
    %cst_13 = arith.constant dense<0.000000e+00> : vector<64x128xf32>
    %33 = tpu.matmul %31, %32, %cst_13 {dimension_numbers = #tpu.dot_dimension_numbers<[1], [0], [0], [1], [0, 0, 1, 1], [], []>} : vector<64x8xbf16>, vector<8x128xbf16>, vector<64x128xf32> -> vector<64x128xf32>
    %34 = arith.addf %29, %33 : vector<64x128xf32>
    %35 = vector.extract_strided_slice %8 {offsets = [0, 1, 2, 0], sizes = [1, 8, 8, 8], strides = [1, 1, 1, 1]} : vector<1x10x10x8xbf16> to vector<1x8x8x8xbf16>
    %36 = vector.shape_cast %35 : vector<1x8x8x8xbf16> to vector<64x8xbf16>
    %c40 = arith.constant 40 : index
    %c0_14 = arith.constant 0 : index
    %37 = vector.load %arg2[%c40, %c0_14] : memref<72x128xbf16, #tpu.memory_space<vmem>>, vector<8x128xbf16>
    %cst_15 = arith.constant dense<0.000000e+00> : vector<64x128xf32>
    %38 = tpu.matmul %36, %37, %cst_15 {dimension_numbers = #tpu.dot_dimension_numbers<[1], [0], [0], [1], [0, 0, 1, 1], [], []>} : vector<64x8xbf16>, vector<8x128xbf16>, vector<64x128xf32> -> vector<64x128xf32>
    %39 = arith.addf %34, %38 : vector<64x128xf32>
    %40 = vector.extract_strided_slice %8 {offsets = [0, 2, 0, 0], sizes = [1, 8, 8, 8], strides = [1, 1, 1, 1]} : vector<1x10x10x8xbf16> to vector<1x8x8x8xbf16>
    %41 = vector.shape_cast %40 : vector<1x8x8x8xbf16> to vector<64x8xbf16>
    %c48 = arith.constant 48 : index
    %c0_16 = arith.constant 0 : index
    %42 = vector.load %arg2[%c48, %c0_16] : memref<72x128xbf16, #tpu.memory_space<vmem>>, vector<8x128xbf16>
    %cst_17 = arith.constant dense<0.000000e+00> : vector<64x128xf32>
    %43 = tpu.matmul %41, %42, %cst_17 {dimension_numbers = #tpu.dot_dimension_numbers<[1], [0], [0], [1], [0, 0, 1, 1], [], []>} : vector<64x8xbf16>, vector<8x128xbf16>, vector<64x128xf32> -> vector<64x128xf32>
    %44 = arith.addf %39, %43 : vector<64x128xf32>
    %45 = vector.extract_strided_slice %8 {offsets = [0, 2, 1, 0], sizes = [1, 8, 8, 8], strides = [1, 1, 1, 1]} : vector<1x10x10x8xbf16> to vector<1x8x8x8xbf16>
    %46 = vector.shape_cast %45 : vector<1x8x8x8xbf16> to vector<64x8xbf16>
    %c56 = arith.constant 56 : index
    %c0_18 = arith.constant 0 : index
    %47 = vector.load %arg2[%c56, %c0_18] : memref<72x128xbf16, #tpu.memory_space<vmem>>, vector<8x128xbf16>
    %cst_19 = arith.constant dense<0.000000e+00> : vector<64x128xf32>
    %48 = tpu.matmul %46, %47, %cst_19 {dimension_numbers = #tpu.dot_dimension_numbers<[1], [0], [0], [1], [0, 0, 1, 1], [], []>} : vector<64x8xbf16>, vector<8x128xbf16>, vector<64x128xf32> -> vector<64x128xf32>
    %49 = arith.addf %44, %48 : vector<64x128xf32>
    %50 = vector.extract_strided_slice %8 {offsets = [0, 2, 2, 0], sizes = [1, 8, 8, 8], strides = [1, 1, 1, 1]} : vector<1x10x10x8xbf16> to vector<1x8x8x8xbf16>
    %51 = vector.shape_cast %50 : vector<1x8x8x8xbf16> to vector<64x8xbf16>
    %c64 = arith.constant 64 : index
    %c0_20 = arith.constant 0 : index
    %52 = vector.load %arg2[%c64, %c0_20] : memref<72x128xbf16, #tpu.memory_space<vmem>>, vector<8x128xbf16>
    %cst_21 = arith.constant dense<0.000000e+00> : vector<64x128xf32>
    %53 = tpu.matmul %51, %52, %cst_21 {dimension_numbers = #tpu.dot_dimension_numbers<[1], [0], [0], [1], [0, 0, 1, 1], [], []>} : vector<64x8xbf16>, vector<8x128xbf16>, vector<64x128xf32> -> vector<64x128xf32>
    %54 = arith.addf %49, %53 : vector<64x128xf32>
    %c0_22 = arith.constant 0 : index
    %c0_23 = arith.constant 0 : index
    %55 = vector.load %arg3[%c0_22, %c0_23] : memref<1x128xf32, #tpu.memory_space<vmem>>, vector<1x128xf32>
    %56 = vector.broadcast %55 : vector<1x128xf32> to vector<64x128xf32>
    %57 = arith.addf %54, %56 : vector<64x128xf32>
    %cst_24 = arith.constant dense<0.000000e+00> : vector<128xf32>
    %58 = vector.multi_reduction <add>, %57, %cst_24 [0] : vector<64x128xf32> to vector<128xf32>
    %59 = vector.shape_cast %58 : vector<128xf32> to vector<1x128xf32>
    %c0_25 = arith.constant 0 : index
    %c0_26 = arith.constant 0 : index
    %c0_27 = arith.constant 0 : index
    %60 = vector.load %arg5[%c0_25, %c0_26, %c0_27] : memref<1x2x128xf32, #tpu.memory_space<vmem>>, vector<1x1x128xf32>
    %61 = vector.shape_cast %60 : vector<1x1x128xf32> to vector<1x128xf32>
    %62 = vector.shape_cast %59 : vector<1x128xf32> to vector<1x1x128xf32>
    tpu.vector_store %arg5[%c0_25, %c0_26, %c0_27], %62 {strides = array<i32>} : memref<1x2x128xf32, #tpu.memory_space<vmem>>, vector<1x1x128xf32>,
    %63 = arith.mulf %57, %57 : vector<64x128xf32>
    %cst_28 = arith.constant dense<0.000000e+00> : vector<128xf32>
    %64 = vector.multi_reduction <add>, %63, %cst_28 [0] : vector<64x128xf32> to vector<128xf32>
    %65 = vector.shape_cast %64 : vector<128xf32> to vector<1x128xf32>
    %c0_29 = arith.constant 0 : index
    %c1 = arith.constant 1 : index
    %c0_30 = arith.constant 0 : index
    %66 = vector.load %arg5[%c0_29, %c1, %c0_30] : memref<1x2x128xf32, #tpu.memory_space<vmem>>, vector<1x1x128xf32>
    %67 = vector.shape_cast %66 : vector<1x1x128xf32> to vector<1x128xf32>
    %68 = vector.shape_cast %65 : vector<1x128xf32> to vector<1x1x128xf32>
    tpu.vector_store %arg5[%c0_29, %c1, %c0_30], %68 {strides = array<i32>} : memref<1x2x128xf32, #tpu.memory_space<vmem>>, vector<1x1x128xf32>,
    %69 = vector.extract_strided_slice %57 {offsets = [0, 0], sizes = [64, 16], strides = [1, 1]} : vector<64x128xf32> to vector<64x16xf32>
    %70 = arith.truncf %69 : vector<64x16xf32> to vector<64x16xbf16>
    %71 = vector.shape_cast %70 : vector<64x16xbf16> to vector<1x8x8x16xbf16>
    %c0_31 = arith.constant 0 : index
    %c0_32 = arith.constant 0 : index
    %c0_33 = arith.constant 0 : index
    %c0_34 = arith.constant 0 : index
    %72 = vector.load %arg4[%c0_31, %c0_32, %c0_33, %c0_34] : memref<1x8x8x16xbf16, #tpu.memory_space<vmem>>, vector<1x8x8x16xbf16>
    tpu.vector_store %arg4[%c0_31, %c0_32, %c0_33, %c0_34], %71 {strides = array<i32>} : memref<1x8x8x16xbf16, #tpu.memory_space<vmem>>, vector<1x8x8x16xbf16>,
    return
  }
  func.func @transform_0(%arg0: i32) -> (i32, i32, i32, i32) {
    %c0_i32 = arith.constant 0 : i32
    %c0_i32_0 = arith.constant 0 : i32
    %c0_i32_1 = arith.constant 0 : i32
    %c0_i32_2 = arith.constant 0 : i32
    return %arg0, %c0_i32, %c0_i32_0, %c0_i32_1 : i32, i32, i32, i32
  }
  func.func @transform_1(%arg0: i32) -> (i32, i32) {
    %c0_i32 = arith.constant 0 : i32
    %c0_i32_0 = arith.constant 0 : i32
    %c0_i32_1 = arith.constant 0 : i32
    return %c0_i32, %c0_i32_0 : i32, i32
  }
  func.func @transform_2(%arg0: i32) -> (i32, i32) {
    %c0_i32 = arith.constant 0 : i32
    %c0_i32_0 = arith.constant 0 : i32
    %c0_i32_1 = arith.constant 0 : i32
    return %c0_i32, %c0_i32_0 : i32, i32
  }
  func.func @transform_3(%arg0: i32) -> (i32, i32, i32, i32) {
    %c0_i32 = arith.constant 0 : i32
    %c0_i32_0 = arith.constant 0 : i32
    %c0_i32_1 = arith.constant 0 : i32
    %c0_i32_2 = arith.constant 0 : i32
    return %arg0, %c0_i32, %c0_i32_0, %c0_i32_1 : i32, i32, i32, i32
  }
  func.func @transform_4(%arg0: i32) -> (i32, i32, i32) {
    %c0_i32 = arith.constant 0 : i32
    %c0_i32_0 = arith.constant 0 : i32
    %c0_i32_1 = arith.constant 0 : i32
    return %arg0, %c0_i32, %c0_i32_0 : i32, i32, i32
  }
}

</mosaic_0001>

<llo_original>
// kernel: tpu_custom_call.1
$region0: #{tpu_custom_call.1}
  #allocation0 [shape = 'u32[]', space=smem, size = 0x4, offset = 0x4, fixed_abs, tag = 'smem constant byte address 0x4 - core index']
  #allocation1 [shape = 'u32[144,128]{1,0:T(1,128)}', space=vmem, size = 0x12000, scoped, tag = 'internal scratch']
  %s0 = inlined_call_operand.vmem [shape: f32[2,10,10,32], index: 0, kind: input, shape index: {}]
  %s1 = inlined_call_operand.vmem [shape: bf16[72,128], index: 1, kind: input, shape index: {}]
  %s2 = inlined_call_operand.vmem [shape: f32[1,128], index: 2, kind: input, shape index: {}]
  %s3 = inlined_call_operand.hbm [shape: bf16[2,8,8,16], index: 3, kind: output, shape index: {0}]
  %s4 = inlined_call_operand.hbm [shape: f32[2,2,128], index: 4, kind: output, shape index: {1}]
  %5 = xla_tuple %s3, %s4
  %s6 = sld [smem:[#allocation0]]
  $region53: #{tpu_custom_call.1} parent=0
    _
  %s8 = ssub.s32 1, %s6
  %s9 = scalar_select 0, %s8, %s6
  $region1: #{tpu_custom_call.1} parent=0
    #allocation2 [shape = 'u8[32768]{0}', space=vmem, size = 0x8000, scoped, tag = 'output window, operand 0']
    #allocation3 [shape = 's32[2]{0}', space=sflag, size = 0x8, scoped, tag = 'scoped memory for tpu_custom_call.1']
    #allocation4 [shape = 'u8[2048]{0}', space=vmem, size = 0x800, scoped, tag = 'output window, operand 1']
    #allocation5 [shape = 's32[2]{0}', space=sflag, size = 0x8, scoped, tag = 'scoped memory for tpu_custom_call.1']
    %10 = vsyncpa [#allocation3], 0
    %s11 = scalar_lea.sflag [#allocation3], 1
    %12 = vsyncpa %s11, 0
    %13 = vsyncpa [#allocation5], 0
    %s14 = scalar_lea.sflag [#allocation5], 1
    %15 = vsyncpa %s14, 0
    loop: start=0, step=1, limit=4
    $region2: #{tpu_custom_call.1} parent=1 // loop_pre_header
      _
    $region3: #{tpu_custom_call.1} parent=1 // loop_header
      %s17 = sphi 0, %s21
      %p18 = scmp.ge.s32.totalorder %s17, 4
      %s27 = sphi 0, %s29
      %s30 = sphi 0, %s27
      %s31 = sphi 0, %s30
      %s47 = sphi 0, %s31
      %s51 = sphi 0, %s51
      %s53 = sphi 0, %s51
      %s54 = sphi 0, %s53
      %s68 = sphi 0, %s54
      %s72 = sphi 0, %s72
      %s74 = sphi 0, %s72
      %s75 = sphi 0, %s74
      %s89 = sphi 0, %s75
      %s95 = sphi 0, %s97
      %s98 = sphi 0, %s95
      %s99 = sphi 0, %s98
      %s115 = sphi 0, %s99
      %s121 = sphi 0, %s123
      %s124 = sphi 0, %s121
      %s125 = sphi 0, %s124
      %s141 = sphi 0, %s125
    $region4: #{tpu_custom_call.1} parent=1 // loop_header_branch
      %20 = sbr.rel (%p18) target = $region8
    $region5: #{tpu_custom_call.1} parent=1 // loop_body
      %s22 = ssub.s32 %s17, 1
      %s23 = ssub.s32 %s17, 2
      %s24 = sadd.s32 %s17, 1
      %s25 = ssub.s32 %s17, %s24
      %p26 = scmp.eq.s32.totalorder %s25, 0
      %s28 = sadd.s32 %s27, 1
      %s29 = scalar_select %p26, %s27, %s28
      %p32 = pneg %p26
      %p33 = scmp.eq.s32.totalorder %s17, 1
      %p34 = por %p32, %p33
      %p35 = scmp.ne.s32.totalorder %s27, %s30
      %p36 = scmp.eq.s32.totalorder %s17, 0
      %p37 = por %p35, %p36
      %p38 = scmp.ne.s32.totalorder %s27, %s30
      %p39 = scmp.eq.s32.totalorder %s22, 1
      %p40 = por %p38, %p39
      %p41 = scmp.ne.s32.totalorder %s30, %s31
      %p42 = scmp.eq.s32.totalorder %s22, 0
      %p43 = por %p41, %p42
      %p44 = scmp.ne.s32.totalorder %s30, %s31
      %p45 = scmp.eq.s32.totalorder %s23, 1
      %p46 = por %p44, %p45
      %p48 = scmp.ne.s32.totalorder %s31, %s47
      %p49 = scmp.eq.s32.totalorder %s23, 0
      %p50 = por %p48, %p49
      %s52 = sadd.s32 %s51, 1
      %p55 = scmp.eq.s32.totalorder %s17, 1
      %p56 = scmp.ne.s32.totalorder %s51, %s53
      %p57 = scmp.eq.s32.totalorder %s17, 0
      %p58 = por %p56, %p57
      %p59 = scmp.ne.s32.totalorder %s51, %s53
      %p60 = scmp.eq.s32.totalorder %s22, 1
      %p61 = por %p59, %p60
      %p62 = scmp.ne.s32.totalorder %s53, %s54
      %p63 = scmp.eq.s32.totalorder %s22, 0
      %p64 = por %p62, %p63
      %p65 = scmp.ne.s32.totalorder %s53, %s54
      %p66 = scmp.eq.s32.totalorder %s23, 1
      %p67 = por %p65, %p66
      %p69 = scmp.ne.s32.totalorder %s54, %s68
      %p70 = scmp.eq.s32.totalorder %s23, 0
      %p71 = por %p69, %p70
      %s73 = sadd.s32 %s72, 1
      %p76 = scmp.eq.s32.totalorder %s17, 1
      %p77 = scmp.ne.s32.totalorder %s72, %s74
      %p78 = scmp.eq.s32.totalorder %s17, 0
      %p79 = por %p77, %p78
      %p80 = scmp.ne.s32.totalorder %s72, %s74
      %p81 = scmp.eq.s32.totalorder %s22, 1
      %p82 = por %p80, %p81
      %p83 = scmp.ne.s32.totalorder %s74, %s75
      %p84 = scmp.eq.s32.totalorder %s22, 0
      %p85 = por %p83, %p84
      %p86 = scmp.ne.s32.totalorder %s74, %s75
      %p87 = scmp.eq.s32.totalorder %s23, 1
      %p88 = por %p86, %p87
      %p90 = scmp.ne.s32.totalorder %s75, %s89
      %p91 = scmp.eq.s32.totalorder %s23, 0
      %p92 = por %p90, %p91
      %s93 = ssub.s32 %s17, %s24
      %p94 = scmp.eq.s32.totalorder %s93, 0
      %s96 = sadd.s32 %s95, 1
      %s97 = scalar_select %p94, %s95, %s96
      %p100 = pneg %p94
      %p101 = scmp.eq.s32.totalorder %s17, 1
      %p102 = por %p100, %p101
      %p103 = scmp.ne.s32.totalorder %s95, %s98
      %p104 = scmp.eq.s32.totalorder %s17, 0
      %p105 = por %p103, %p104
      %p106 = scmp.ne.s32.totalorder %s95, %s98
      %p107 = scmp.eq.s32.totalorder %s22, 1
      %p108 = por %p106, %p107
      %p109 = scmp.ne.s32.totalorder %s98, %s99
      %p110 = scmp.eq.s32.totalorder %s22, 0
      %p111 = por %p109, %p110
      %p112 = scmp.ne.s32.totalorder %s98, %s99
      %p113 = scmp.eq.s32.totalorder %s23, 1
      %p114 = por %p112, %p113
      %p116 = scmp.ne.s32.totalorder %s99, %s115
      %p117 = scmp.eq.s32.totalorder %s23, 0
      %p118 = por %p116, %p117
      %s119 = ssub.s32 %s17, %s24
      %p120 = scmp.eq.s32.totalorder %s119, 0
      %s122 = sadd.s32 %s121, 1
      %s123 = scalar_select %p120, %s121, %s122
      %p126 = pneg %p120
      %p127 = scmp.eq.s32.totalorder %s17, 1
      %p128 = por %p126, %p127
      %p129 = scmp.ne.s32.totalorder %s121, %s124
      %p130 = scmp.eq.s32.totalorder %s17, 0
      %p131 = por %p129, %p130
      %p132 = scmp.ne.s32.totalorder %s121, %s124
      %p133 = scmp.eq.s32.totalorder %s22, 1
      %p134 = por %p132, %p133
      %p135 = scmp.ne.s32.totalorder %s124, %s125
      %p136 = scmp.eq.s32.totalorder %s22, 0
      %p137 = por %p135, %p136
      %p138 = scmp.ne.s32.totalorder %s124, %s125
      %p139 = scmp.eq.s32.totalorder %s23, 1
      %p140 = por %p138, %p139
      %p142 = scmp.ne.s32.totalorder %s125, %s141
      %p143 = scmp.eq.s32.totalorder %s23, 0
      %p144 = por %p142, %p143
      %p145 = scmp.le.s32.totalorder 1, %s17
      %p146 = scmp.lt.s32.totalorder %s17, 3
      %p147 = pnand %p145, %p146
      %p148 = pneg %p147
      // Predicated region
      $region9: #{tpu_custom_call.1} parent=5 // pred_check
        _
      $region10: #{tpu_custom_call.1} parent=5 // pred_check_branch
        %150 = sbr.rel (%p147) target = $region12
      $region11: #{tpu_custom_call.1} parent=5 // pred_region
        %s151 = ssub.s32 %s17, 1
        // Predicated region
        $region13: #{tpu_custom_call.1} parent=11 // pred_check
          %p152 = pneg %p64
        $region14: #{tpu_custom_call.1} parent=11 // pred_check_branch
          %154 = sbr.rel (%p152) target = $region16
        $region15: #{tpu_custom_call.1} parent=11 // pred_region
          _
        $region16: #{tpu_custom_call.1} parent=11 // pred_fallthru
          _
        // Predicated region
        $region17: #{tpu_custom_call.1} parent=11 // pred_check
          %p155 = pneg %p85
        $region18: #{tpu_custom_call.1} parent=11 // pred_check_branch
          %157 = sbr.rel (%p155) target = $region20
        $region19: #{tpu_custom_call.1} parent=11 // pred_region
          _
        $region20: #{tpu_custom_call.1} parent=11 // pred_fallthru
          _
      $region12: #{tpu_custom_call.1} parent=5 // pred_fallthru
        _
      %p158 = scmp.lt.s32.totalorder %s17, 2
      // Predicated region
      $region21: #{tpu_custom_call.1} parent=5 // pred_check
        %p159 = pneg %p158
      $region22: #{tpu_custom_call.1} parent=5 // pred_check_branch
        %161 = sbr.rel (%p159) target = $region24
      $region23: #{tpu_custom_call.1} parent=5 // pred_region
        // Predicated region
        $region25: #{tpu_custom_call.1} parent=23 // pred_check
          %p162 = pneg %p37
        $region26: #{tpu_custom_call.1} parent=23 // pred_check_branch
          %164 = sbr.rel (%p162) target = $region28
        $region27: #{tpu_custom_call.1} parent=23 // pred_region
          %p165 = scmp.lt.s32.totalorder %s17, 1
          %s166 = scalar_select %p165, %s17, 1
          %s167 = smul.addr %s166, 20
          %s168 = smul.addr %s167, 8
          %s169 = scalar_lea.vmem %s0, %s168
        $region28: #{tpu_custom_call.1} parent=23 // pred_fallthru
          _
      $region24: #{tpu_custom_call.1} parent=5 // pred_fallthru
        _
      %p170 = scmp.le.s32.totalorder 1, %s17
      %p171 = scmp.lt.s32.totalorder %s17, 3
      %p172 = pnand %p170, %p171
      %p173 = pneg %p172
      // Predicated region
      $region29: #{tpu_custom_call.1} parent=5 // pred_check
        _
      $region30: #{tpu_custom_call.1} parent=5 // pred_check_branch
        %175 = sbr.rel (%p172) target = $region32
      $region31: #{tpu_custom_call.1} parent=5 // pred_region
        %s176 = ssub.s32 %s17, 1
        %p177 = scmp.lt.s32.totalorder %s22, 1
        %s178 = scalar_select %p177, %s22, 1
        %s179 = smul.addr %s178, 20
        %s180 = smul.addr %s179, 8
        %s181 = scalar_lea.vmem %s0, %s180
        %p182 = pneg %p43
        %p183 = pneg %p40
        %p184 = pneg %p64
        %p185 = pneg %p61
        %p186 = pneg %p85
        %p187 = pneg %p82
        %p188 = pneg %p111
        %p189 = pneg %p108
        %s190 = sand.u32 %s98, 1
        %s191 = scalar_lea.sflag [#allocation3], %s190
        %s192 = sand.u32 %s98, 1
        %s193 = smul.addr %s192, 32
        %s194 = scalar_lea.vmem [#allocation2], %s193
        %p195 = pneg %p137
        %p196 = pneg %p134
        %s197 = sand.u32 %s124, 1
        %s198 = scalar_lea.sflag [#allocation5], %s197
        %s199 = sand.u32 %s124, 1
        %s200 = smul.addr %s199, 2
        %s201 = scalar_lea.vmem [#allocation4], %s200
        %p202 = scmp.lt.s32.totalorder %s22, 1
        %s203 = scalar_select %p202, %s22, 1
        %s204 = smul.addr %s203, 20
        %s205 = smul.addr %s204, 8
        %s206 = scalar_lea.vmem %s0, %s205
        %v208 = vld [vmem:[%s206] sm:$0xff]
        %v209 = vld [vmem:[%s206 + $0x8] sm:$0x3]
        %v210 = vld [vmem:[%s206 + $0x10] sm:$0xff]
        %v211 = vld [vmem:[%s206 + $0x18] sm:$0x3]
        %v212 = vld [vmem:[%s206 + $0x20] sm:$0xff]
        %v213 = vld [vmem:[%s206 + $0x28] sm:$0x3]
        %v214 = vld [vmem:[%s206 + $0x30] sm:$0xff]
        %v215 = vld [vmem:[%s206 + $0x38] sm:$0x3]
        %v216 = vld [vmem:[%s206 + $0x40] sm:$0xff]
        %v217 = vld [vmem:[%s206 + $0x48] sm:$0x3]
        %v218 = vld [vmem:[%s206 + $0x50] sm:$0xff]
        %v219 = vld [vmem:[%s206 + $0x58] sm:$0x3]
        %v220 = vld [vmem:[%s206 + $0x60] sm:$0xff]
        %v221 = vld [vmem:[%s206 + $0x68] sm:$0x3]
        %v222 = vld [vmem:[%s206 + $0x70] sm:$0xff]
        %v223 = vld [vmem:[%s206 + $0x78] sm:$0x3]
        %v224 = vld [vmem:[%s206 + $0x80] sm:$0xff]
        %v225 = vld [vmem:[%s206 + $0x88] sm:$0x3]
        %v226 = vld [vmem:[%s206 + $0x90] sm:$0xff]
        %v227 = vld [vmem:[%s206 + $0x98] sm:$0x3]
        %248 = vrot.lane.b32.xlu0 %v208, 120
        %v249 = vpop.permute.xlu0 %248
        %250 = vrot.lane.b32.xlu0 %v209, 120
        %v251 = vpop.permute.xlu0 %250
        %252 = vrot.lane.b32.xlu0 %v210, 120
        %v253 = vpop.permute.xlu0 %252
        %254 = vrot.lane.b32.xlu0 %v211, 120
        %v255 = vpop.permute.xlu0 %254
        %256 = vrot.lane.b32.xlu0 %v212, 120
        %v257 = vpop.permute.xlu0 %256
        %258 = vrot.lane.b32.xlu0 %v213, 120
        %v259 = vpop.permute.xlu0 %258
        %260 = vrot.lane.b32.xlu0 %v214, 120
        %v261 = vpop.permute.xlu0 %260
        %262 = vrot.lane.b32.xlu0 %v215, 120
        %v263 = vpop.permute.xlu0 %262
        %264 = vrot.lane.b32.xlu0 %v216, 120
        %v265 = vpop.permute.xlu0 %264
        %266 = vrot.lane.b32.xlu0 %v217, 120
        %v267 = vpop.permute.xlu0 %266
        %268 = vrot.lane.b32.xlu0 %v218, 120
        %v269 = vpop.permute.xlu0 %268
        %270 = vrot.lane.b32.xlu0 %v219, 120
        %v271 = vpop.permute.xlu0 %270
        %272 = vrot.lane.b32.xlu0 %v220, 120
        %v273 = vpop.permute.xlu0 %272
        %274 = vrot.lane.b32.xlu0 %v221, 120
        %v275 = vpop.permute.xlu0 %274
        %276 = vrot.lane.b32.xlu0 %v222, 120
        %v277 = vpop.permute.xlu0 %276
        %278 = vrot.lane.b32.xlu0 %v223, 120
        %v279 = vpop.permute.xlu0 %278
        %280 = vrot.lane.b32.xlu0 %v224, 120
        %v281 = vpop.permute.xlu0 %280
        %282 = vrot.lane.b32.xlu0 %v225, 120
        %v283 = vpop.permute.xlu0 %282
        %284 = vrot.lane.b32.xlu0 %v226, 120
        %v285 = vpop.permute.xlu0 %284
        %286 = vrot.lane.b32.xlu0 %v227, 120
        %v287 = vpop.permute.xlu0 %286
        %v308 = vmax.f32 %v208, %v249
        %v309 = vmax.f32 %v209, %v251
        %v310 = vmax.f32 %v210, %v253
        %v311 = vmax.f32 %v211, %v255
        %v312 = vmax.f32 %v212, %v257
        %v313 = vmax.f32 %v213, %v259
        %v314 = vmax.f32 %v214, %v261
        %v315 = vmax.f32 %v215, %v263
        %v316 = vmax.f32 %v216, %v265
        %v317 = vmax.f32 %v217, %v267
        %v318 = vmax.f32 %v218, %v269
        %v319 = vmax.f32 %v219, %v271
        %v320 = vmax.f32 %v220, %v273
        %v321 = vmax.f32 %v221, %v275
        %v322 = vmax.f32 %v222, %v277
        %v323 = vmax.f32 %v223, %v279
        %v324 = vmax.f32 %v224, %v281
        %v325 = vmax.f32 %v225, %v283
        %v326 = vmax.f32 %v226, %v285
        %v327 = vmax.f32 %v227, %v287
        %348 = vrot.lane.b32.xlu0 %v308, 112
        %v349 = vpop.permute.xlu0 %348
        %350 = vrot.lane.b32.xlu0 %v309, 112
        %v351 = vpop.permute.xlu0 %350
        %352 = vrot.lane.b32.xlu0 %v310, 112
        %v353 = vpop.permute.xlu0 %352
        %354 = vrot.lane.b32.xlu0 %v311, 112
        %v355 = vpop.permute.xlu0 %354
        %356 = vrot.lane.b32.xlu0 %v312, 112
        %v357 = vpop.permute.xlu0 %356
        %358 = vrot.lane.b32.xlu0 %v313, 112
        %v359 = vpop.permute.xlu0 %358
        %360 = vrot.lane.b32.xlu0 %v314, 112
        %v361 = vpop.permute.xlu0 %360
        %362 = vrot.lane.b32.xlu0 %v315, 112
        %v363 = vpop.permute.xlu0 %362
        %364 = vrot.lane.b32.xlu0 %v316, 112
        %v365 = vpop.permute.xlu0 %364
        %366 = vrot.lane.b32.xlu0 %v317, 112
        %v367 = vpop.permute.xlu0 %366
        %368 = vrot.lane.b32.xlu0 %v318, 112
        %v369 = vpop.permute.xlu0 %368
        %370 = vrot.lane.b32.xlu0 %v319, 112
        %v371 = vpop.permute.xlu0 %370
        %372 = vrot.lane.b32.xlu0 %v320, 112
        %v373 = vpop.permute.xlu0 %372
        %374 = vrot.lane.b32.xlu0 %v321, 112
        %v375 = vpop.permute.xlu0 %374
        %376 = vrot.lane.b32.xlu0 %v322, 112
        %v377 = vpop.permute.xlu0 %376
        %378 = vrot.lane.b32.xlu0 %v323, 112
        %v379 = vpop.permute.xlu0 %378
        %380 = vrot.lane.b32.xlu0 %v324, 112
        %v381 = vpop.permute.xlu0 %380
        %382 = vrot.lane.b32.xlu0 %v325, 112
        %v383 = vpop.permute.xlu0 %382
        %384 = vrot.lane.b32.xlu0 %v326, 112
        %v385 = vpop.permute.xlu0 %384
        %386 = vrot.lane.b32.xlu0 %v327, 112
        %v387 = vpop.permute.xlu0 %386
        %v408 = vmax.f32 %v308, %v349
        %v409 = vmax.f32 %v309, %v351
        %v410 = vmax.f32 %v310, %v353
        %v411 = vmax.f32 %v311, %v355
        %v412 = vmax.f32 %v312, %v357
        %v413 = vmax.f32 %v313, %v359
        %v414 = vmax.f32 %v314, %v361
        %v415 = vmax.f32 %v315, %v363
        %v416 = vmax.f32 %v316, %v365
        %v417 = vmax.f32 %v317, %v367
        %v418 = vmax.f32 %v318, %v369
        %v419 = vmax.f32 %v319, %v371
        %v420 = vmax.f32 %v320, %v373
        %v421 = vmax.f32 %v321, %v375
        %v422 = vmax.f32 %v322, %v377
        %v423 = vmax.f32 %v323, %v379
        %v424 = vmax.f32 %v324, %v381
        %v425 = vmax.f32 %v325, %v383
        %v426 = vmax.f32 %v326, %v385
        %v427 = vmax.f32 %v327, %v387
        %v428 = vpack.c.bf16 %v409, %v408
        %v429 = vpack.c.bf16 %v411, %v410
        %v430 = vpack.c.bf16 %v413, %v412
        %v431 = vpack.c.bf16 %v415, %v414
        %v432 = vpack.c.bf16 %v417, %v416
        %v433 = vpack.c.bf16 %v419, %v418
        %v434 = vpack.c.bf16 %v421, %v420
        %v435 = vpack.c.bf16 %v423, %v422
        %v436 = vpack.c.bf16 %v425, %v424
        %v437 = vpack.c.bf16 %v427, %v426
        %v438 = vld [vmem:[%s1] sm:$0xf]
        %v447 = vunpack.c.l.b16 %v428
        %v448 = vunpack.c.h.b16 %v428
        %v449 = vunpack.c.l.b16 %v429
        %v450 = vunpack.c.h.b16 %v429
        %v451 = vunpack.c.l.b16 %v430
        %v452 = vunpack.c.h.b16 %v430
        %v453 = vunpack.c.l.b16 %v431
        %v454 = vunpack.c.h.b16 %v431
        %v455 = vunpack.c.l.b16 %v432
        %v456 = vunpack.c.h.b16 %v432
        %v457 = vunpack.c.l.b16 %v433
        %v458 = vunpack.c.h.b16 %v433
        %v459 = vunpack.c.l.b16 %v434
        %v460 = vunpack.c.h.b16 %v434
        %v461 = vunpack.c.l.b16 %v435
        %v462 = vunpack.c.h.b16 %v435
        %v463 = vpack.c.b16 %v447, %v447
        %v464 = vpack.c.b16 %v448, %v448
        %v465 = vpack.c.b16 %v449, %v449
        %v466 = vpack.c.b16 %v450, %v450
        %v467 = vpack.c.b16 %v451, %v451
        %v468 = vpack.c.b16 %v452, %v452
        %v469 = vpack.c.b16 %v453, %v453
        %v470 = vpack.c.b16 %v454, %v454
        %v471 = vpack.c.b16 %v455, %v455
        %v472 = vpack.c.b16 %v456, %v456
        %v473 = vpack.c.b16 %v457, %v457
        %v474 = vpack.c.b16 %v458, %v458
        %v475 = vpack.c.b16 %v459, %v459
        %v476 = vpack.c.b16 %v460, %v460
        %v477 = vpack.c.b16 %v461, %v461
        %v478 = vpack.c.b16 %v462, %v462
        %vm479 = vsmask.f32 3328
        %vm480 = vsmask.f32 7440
        %vm481 = vmor %vm479, %vm480
        %v483 = vshrl.u32 %v463, 16
        %v485 = vrot.slane %v483, 4
        %v486 = vshll.u32 %v463, 16
        %v488 = vrot.slane %v486, 5
        %v489 = vor.u32 %v485, %v488
        %v490 = vrot.slane %v489, 4
        %v492 = vshll.u32 %v464, 16
        %v494 = vrot.slane %v492, 5
        %v495 = vsel %vm481, %v490, %v494
        %v497 = vshrl.u32 %v465, 16
        %v499 = vrot.slane %v497, 4
        %v500 = vshll.u32 %v465, 16
        %v502 = vrot.slane %v500, 5
        %v503 = vor.u32 %v499, %v502
        %v504 = vrot.slane %v503, 4
        %v506 = vshll.u32 %v466, 16
        %v508 = vrot.slane %v506, 5
        %v509 = vsel %vm481, %v504, %v508
        %v511 = vshrl.u32 %v467, 16
        %v513 = vrot.slane %v511, 4
        %v514 = vshll.u32 %v467, 16
        %v516 = vrot.slane %v514, 5
        %v517 = vor.u32 %v513, %v516
        %v518 = vrot.slane %v517, 4
        %v520 = vshll.u32 %v468, 16
        %v522 = vrot.slane %v520, 5
        %v523 = vsel %vm481, %v518, %v522
        %v525 = vshrl.u32 %v469, 16
        %v527 = vrot.slane %v525, 4
        %v528 = vshll.u32 %v469, 16
        %v530 = vrot.slane %v528, 5
        %v531 = vor.u32 %v527, %v530
        %v532 = vrot.slane %v531, 4
        %v534 = vshll.u32 %v470, 16
        %v536 = vrot.slane %v534, 5
        %v537 = vsel %vm481, %v532, %v536
        %v539 = vshrl.u32 %v471, 16
        %v541 = vrot.slane %v539, 4
        %v542 = vshll.u32 %v471, 16
        %v544 = vrot.slane %v542, 5
        %v545 = vor.u32 %v541, %v544
        %v546 = vrot.slane %v545, 4
        %v548 = vshll.u32 %v472, 16
        %v550 = vrot.slane %v548, 5
        %v551 = vsel %vm481, %v546, %v550
        %v553 = vshrl.u32 %v473, 16
        %v555 = vrot.slane %v553, 4
        %v556 = vshll.u32 %v473, 16
        %v558 = vrot.slane %v556, 5
        %v559 = vor.u32 %v555, %v558
        %v560 = vrot.slane %v559, 4
        %v562 = vshll.u32 %v474, 16
        %v564 = vrot.slane %v562, 5
        %v565 = vsel %vm481, %v560, %v564
        %v567 = vshrl.u32 %v475, 16
        %v569 = vrot.slane %v567, 4
        %v570 = vshll.u32 %v475, 16
        %v572 = vrot.slane %v570, 5
        %v573 = vor.u32 %v569, %v572
        %v574 = vrot.slane %v573, 4
        %v576 = vshll.u32 %v476, 16
        %v578 = vrot.slane %v576, 5
        %v579 = vsel %vm481, %v574, %v578
        %v581 = vshrl.u32 %v477, 16
        %v583 = vrot.slane %v581, 4
        %v584 = vshll.u32 %v477, 16
        %v586 = vrot.slane %v584, 5
        %v587 = vor.u32 %v583, %v586
        %v588 = vrot.slane %v587, 4
        %v590 = vshll.u32 %v478, 16
        %v592 = vrot.slane %v590, 5
        %v593 = vsel %vm481, %v588, %v592
        %v594 = vld [vmem:[%s1 + $0x4] sm:$0xf]
        %v595 = vunpack.c.l.b16 %v495
        %v596 = vunpack.c.l.b16 %v509
        %v597 = vunpack.c.l.b16 %v523
        %v598 = vunpack.c.l.b16 %v537
        %v599 = vunpack.c.l.b16 %v551
        %v600 = vunpack.c.l.b16 %v565
        %v601 = vunpack.c.l.b16 %v579
        %v602 = vunpack.c.l.b16 %v593
        %v603 = vpack.c.b16 %v596, %v595
        %v604 = vpack.c.b16 %v598, %v597
        %v605 = vpack.c.b16 %v600, %v599
        %v606 = vpack.c.b16 %v602, %v601
        %vm607 = vcmask 64512
        %v609 = vsel %vm607, %v603, 0
        %v612 = vsel %vm607, %v604, 0
        %v615 = vsel %vm607, %v605, 0
        %v618 = vsel %vm607, %v606, 0
        %vm620 = vcmask 1043456
        %v622 = vsel %vm620, %v594, 0
        %624 = vmatprep.subr.bf16.mxu0 0
        %625 = vmatpush1.bf16.msra.mxu0 %v622
        %626 = vmatprep.subr.bf16.mxu0 0
        %627 = vmatpush1.bf16.msra.mxu0 0
        %628 = vmatprep.subr.bf16.mxu0 0
        %629 = vmatpush1.bf16.msra.mxu0 0
        %630 = vmatprep.subr.bf16.mxu0 0
        %631 = vmatpush1.bf16.msra.mxu0 0
        %632 = vmatprep.subr.bf16.mxu0 0
        %633 = vmatpush1.bf16.msra.mxu0 0
        %634 = vmatprep.subr.bf16.mxu0 0
        %635 = vmatpush1.bf16.msra.mxu0 0
        %636 = vmatprep.subr.bf16.mxu0 0
        %637 = vmatpush1.bf16.msra.mxu0 0
        %638 = vmatprep.subr.bf16.mxu0 0
        %639 = vmatpush1.bf16.msra.mxu0 0
        %640 = vmatprep.subr.bf16.mxu0 0
        %641 = vmatpush1.bf16.msra.mxu0 0
        %642 = vmatprep.subr.bf16.mxu0 0
        %643 = vmatpush1.bf16.msra.mxu0 0
        %644 = vmatprep.subr.bf16.mxu0 0
        %645 = vmatpush1.bf16.msra.mxu0 0
        %646 = vmatprep.subr.bf16.mxu0 0
        %647 = vmatpush1.bf16.msra.mxu0 0
        %648 = vmatprep.subr.bf16.mxu0 0
        %649 = vmatpush1.bf16.msra.mxu0 0
        %650 = vmatprep.subr.bf16.mxu0 0
        %651 = vmatpush1.bf16.msra.mxu0 0
        %652 = vmatprep.subr.bf16.mxu0 0
        %653 = vmatpush1.bf16.msra.mxu0 0
        %654 = vmatprep.subr.bf16.mxu0 0
        %655 = vmatpush1.bf16.msra.mxu0 0
        %656 = vmatprep.mubr.bf16.mxu0 0
        %657 = vmatmul.mubr.bf16.gmra.mrb[0].mxu0 %v609
        %v658 = vpop.f32.mrb[0].mxu0
        %v659 = vadd.f32 0.0, %v658
        %v660 = vpop.f32.mrb[0].mxu0
        %v661 = vpop.f32.mrb[0].mxu0
        %v662 = vadd.f32 0.0, %v661
        %v663 = vpop.f32.mrb[0].mxu0
        %664 = vmatprep.mubr.bf16.mxu0 0
        %665 = vmatmul.mubr.bf16.gmra.mrb[0].mxu0 %v612
        %v666 = vpop.f32.mrb[0].mxu0
        %v667 = vadd.f32 0.0, %v666
        %v668 = vpop.f32.mrb[0].mxu0
        %v669 = vpop.f32.mrb[0].mxu0
        %v670 = vadd.f32 0.0, %v669
        %v671 = vpop.f32.mrb[0].mxu0
        %672 = vmatprep.mubr.bf16.mxu0 0
        %673 = vmatmul.mubr.bf16.gmra.mrb[0].mxu0 %v615
        %v674 = vpop.f32.mrb[0].mxu0
        %v675 = vadd.f32 0.0, %v674
        %v676 = vpop.f32.mrb[0].mxu0
        %v677 = vpop.f32.mrb[0].mxu0
        %v678 = vadd.f32 0.0, %v677
        %v679 = vpop.f32.mrb[0].mxu0
        %680 = vmatprep.mubr.bf16.mxu0 0
        %681 = vmatmul.mubr.bf16.gmra.mrb[0].mxu0 %v618
        %v682 = vpop.f32.mrb[0].mxu0
        %v683 = vadd.f32 0.0, %v682
        %v684 = vpop.f32.mrb[0].mxu0
        %v685 = vpop.f32.mrb[0].mxu0
        %v686 = vadd.f32 0.0, %v685
        %v687 = vpop.f32.mrb[0].mxu0
        %688 = vdwg.mxu0
        %v689 = vpack.c.b16 %v449, %v447
        %v690 = vpack.c.b16 %v453, %v451
        %v691 = vpack.c.b16 %v457, %v455
        %v692 = vpack.c.b16 %v461, %v459
        %v694 = vsel %vm607, %v689, 0
        %v697 = vsel %vm607, %v690, 0
        %v700 = vsel %vm607, %v691, 0
        %v703 = vsel %vm607, %v692, 0
        %v706 = vsel %vm620, %v438, 0
        %708 = vmatprep.subr.bf16.mxu0 0
        %709 = vmatpush1.bf16.msra.mxu0 %v706
        %710 = vmatprep.subr.bf16.mxu0 0
        %711 = vmatpush1.bf16.msra.mxu0 0
        %712 = vmatprep.subr.bf16.mxu0 0
        %713 = vmatpush1.bf16.msra.mxu0 0
        %714 = vmatprep.subr.bf16.mxu0 0
        %715 = vmatpush1.bf16.msra.mxu0 0
        %716 = vmatprep.subr.bf16.mxu0 0
        %717 = vmatpush1.bf16.msra.mxu0 0
        %718 = vmatprep.subr.bf16.mxu0 0
        %719 = vmatpush1.bf16.msra.mxu0 0
        %720 = vmatprep.subr.bf16.mxu0 0
        %721 = vmatpush1.bf16.msra.mxu0 0
        %722 = vmatprep.subr.bf16.mxu0 0
        %723 = vmatpush1.bf16.msra.mxu0 0
        %724 = vmatprep.subr.bf16.mxu0 0
        %725 = vmatpush1.bf16.msra.mxu0 0
        %726 = vmatprep.subr.bf16.mxu0 0
        %727 = vmatpush1.bf16.msra.mxu0 0
        %728 = vmatprep.subr.bf16.mxu0 0
        %729 = vmatpush1.bf16.msra.mxu0 0
        %730 = vmatprep.subr.bf16.mxu0 0
        %731 = vmatpush1.bf16.msra.mxu0 0
        %732 = vmatprep.subr.bf16.mxu0 0
        %733 = vmatpush1.bf16.msra.mxu0 0
        %734 = vmatprep.subr.bf16.mxu0 0
        %735 = vmatpush1.bf16.msra.mxu0 0
        %736 = vmatprep.subr.bf16.mxu0 0
        %737 = vmatpush1.bf16.msra.mxu0 0
        %738 = vmatprep.subr.bf16.mxu0 0
        %739 = vmatpush1.bf16.msra.mxu0 0
        %740 = vmatprep.mubr.bf16.mxu0 0
        %741 = vmatmul.mubr.bf16.gmra.mrb[0].mxu0 %v694
        %v742 = vpop.f32.mrb[0].mxu0
        %v743 = vadd.f32 %v659, %v742
        %v744 = vpop.f32.mrb[0].mxu0
        %v745 = vpop.f32.mrb[0].mxu0
        %v746 = vadd.f32 %v662, %v745
        %v747 = vpop.f32.mrb[0].mxu0
        %748 = vmatprep.mubr.bf16.mxu0 0
        %749 = vmatmul.mubr.bf16.gmra.mrb[0].mxu0 %v697
        %v750 = vpop.f32.mrb[0].mxu0
        %v751 = vadd.f32 %v667, %v750
        %v752 = vpop.f32.mrb[0].mxu0
        %v753 = vpop.f32.mrb[0].mxu0
        %v754 = vadd.f32 %v670, %v753
        %v755 = vpop.f32.mrb[0].mxu0
        %756 = vmatprep.mubr.bf16.mxu0 0
        %757 = vmatmul.mubr.bf16.gmra.mrb[0].mxu0 %v700
        %v758 = vpop.f32.mrb[0].mxu0
        %v759 = vadd.f32 %v675, %v758
        %v760 = vpop.f32.mrb[0].mxu0
        %v761 = vpop.f32.mrb[0].mxu0
        %v762 = vadd.f32 %v678, %v761
        %v763 = vpop.f32.mrb[0].mxu0
        %764 = vmatprep.mubr.bf16.mxu0 0
        %765 = vmatmul.mubr.bf16.gmra.mrb[0].mxu0 %v703
        %v766 = vpop.f32.mrb[0].mxu0
        %v767 = vadd.f32 %v683, %v766
        %v768 = vpop.f32.mrb[0].mxu0
        %v769 = vpop.f32.mrb[0].mxu0
        %v770 = vadd.f32 %v686, %v769
        %v771 = vpop.f32.mrb[0].mxu0
        %772 = vdwg.mxu0
        %vm773 = vcmask 1042432
        %vm774 = vcmask 1046532
        %vm775 = vmor %vm773, %vm774
        %v776 = vrot.slane %v463, 5
        %v777 = vrot.slane %v776, 4
        %v778 = vrot.slane %v464, 5
        %v779 = vsel %vm775, %v777, %v778
        %v780 = vrot.slane %v465, 5
        %v781 = vrot.slane %v780, 4
        %v782 = vrot.slane %v466, 5
        %v783 = vsel %vm775, %v781, %v782
        %v784 = vrot.slane %v467, 5
        %v785 = vrot.slane %v784, 4
        %v786 = vrot.slane %v468, 5
        %v787 = vsel %vm775, %v785, %v786
        %v788 = vrot.slane %v469, 5
        %v789 = vrot.slane %v788, 4
        %v790 = vrot.slane %v470, 5
        %v791 = vsel %vm775, %v789, %v790
        %v792 = vrot.slane %v471, 5
        %v793 = vrot.slane %v792, 4
        %v794 = vrot.slane %v472, 5
        %v795 = vsel %vm775, %v793, %v794
        %v796 = vrot.slane %v473, 5
        %v797 = vrot.slane %v796, 4
        %v798 = vrot.slane %v474, 5
        %v799 = vsel %vm775, %v797, %v798
        %v800 = vrot.slane %v475, 5
        %v801 = vrot.slane %v800, 4
        %v802 = vrot.slane %v476, 5
        %v803 = vsel %vm775, %v801, %v802
        %v804 = vrot.slane %v477, 5
        %v805 = vrot.slane %v804, 4
        %v806 = vrot.slane %v478, 5
        %v807 = vsel %vm775, %v805, %v806
        %v808 = vld [vmem:[%s1 + $0x8] sm:$0xf]
        %v809 = vunpack.c.l.b16 %v779
        %v810 = vunpack.c.l.b16 %v783
        %v811 = vunpack.c.l.b16 %v787
        %v812 = vunpack.c.l.b16 %v791
        %v813 = vunpack.c.l.b16 %v795
        %v814 = vunpack.c.l.b16 %v799
        %v815 = vunpack.c.l.b16 %v803
        %v816 = vunpack.c.l.b16 %v807
        %v817 = vpack.c.b16 %v810, %v809
        %v818 = vpack.c.b16 %v812, %v811
        %v819 = vpack.c.b16 %v814, %v813
        %v820 = vpack.c.b16 %v816, %v815
        %v822 = vsel %vm607, %v817, 0
        %v825 = vsel %vm607, %v818, 0
        %v828 = vsel %vm607, %v819, 0
        %v831 = vsel %vm607, %v820, 0
        %v834 = vsel %vm620, %v808, 0
        %836 = vmatprep.subr.bf16.mxu0 0
        %837 = vmatpush1.bf16.msra.mxu0 %v834
        %838 = vmatprep.subr.bf16.mxu0 0
        %839 = vmatpush1.bf16.msra.mxu0 0
        %840 = vmatprep.subr.bf16.mxu0 0
        %841 = vmatpush1.bf16.msra.mxu0 0
        %842 = vmatprep.subr.bf16.mxu0 0
        %843 = vmatpush1.bf16.msra.mxu0 0
        %844 = vmatprep.subr.bf16.mxu0 0
        %845 = vmatpush1.bf16.msra.mxu0 0
        %846 = vmatprep.subr.bf16.mxu0 0
        %847 = vmatpush1.bf16.msra.mxu0 0
        %848 = vmatprep.subr.bf16.mxu0 0
        %849 = vmatpush1.bf16.msra.mxu0 0
        %850 = vmatprep.subr.bf16.mxu0 0
        %851 = vmatpush1.bf16.msra.mxu0 0
        %852 = vmatprep.subr.bf16.mxu0 0
        %853 = vmatpush1.bf16.msra.mxu0 0
        %854 = vmatprep.subr.bf16.mxu0 0
        %855 = vmatpush1.bf16.msra.mxu0 0
        %856 = vmatprep.subr.bf16.mxu0 0
        %857 = vmatpush1.bf16.msra.mxu0 0
        %858 = vmatprep.subr.bf16.mxu0 0
        %859 = vmatpush1.bf16.msra.mxu0 0
        %860 = vmatprep.subr.bf16.mxu0 0
        %861 = vmatpush1.bf16.msra.mxu0 0
        %862 = vmatprep.subr.bf16.mxu0 0
        %863 = vmatpush1.bf16.msra.mxu0 0
        %864 = vmatprep.subr.bf16.mxu0 0
        %865 = vmatpush1.bf16.msra.mxu0 0
        %866 = vmatprep.subr.bf16.mxu0 0
        %867 = vmatpush1.bf16.msra.mxu0 0
        %868 = vmatprep.mubr.bf16.mxu0 0
        %869 = vmatmul.mubr.bf16.gmra.mrb[0].mxu0 %v822
        %v870 = vpop.f32.mrb[0].mxu0
        %v871 = vadd.f32 0.0, %v870
        %v872 = vpop.f32.mrb[0].mxu0
        %v873 = vpop.f32.mrb[0].mxu0
        %v874 = vadd.f32 0.0, %v873
        %v875 = vpop.f32.mrb[0].mxu0
        %876 = vmatprep.mubr.bf16.mxu0 0
        %877 = vmatmul.mubr.bf16.gmra.mrb[0].mxu0 %v825
        %v878 = vpop.f32.mrb[0].mxu0
        %v879 = vadd.f32 0.0, %v878
        %v880 = vpop.f32.mrb[0].mxu0
        %v881 = vpop.f32.mrb[0].mxu0
        %v882 = vadd.f32 0.0, %v881
        %v883 = vpop.f32.mrb[0].mxu0
        %884 = vmatprep.mubr.bf16.mxu0 0
        %885 = vmatmul.mubr.bf16.gmra.mrb[0].mxu0 %v828
        %v886 = vpop.f32.mrb[0].mxu0
        %v887 = vadd.f32 0.0, %v886
        %v888 = vpop.f32.mrb[0].mxu0
        %v889 = vpop.f32.mrb[0].mxu0
        %v890 = vadd.f32 0.0, %v889
        %v891 = vpop.f32.mrb[0].mxu0
        %892 = vmatprep.mubr.bf16.mxu0 0
        %893 = vmatmul.mubr.bf16.gmra.mrb[0].mxu0 %v831
        %v894 = vpop.f32.mrb[0].mxu0
        %v895 = vadd.f32 0.0, %v894
        %v896 = vpop.f32.mrb[0].mxu0
        %v897 = vpop.f32.mrb[0].mxu0
        %v898 = vadd.f32 0.0, %v897
        %v899 = vpop.f32.mrb[0].mxu0
        %900 = vdwg.mxu0
        %v901 = vadd.f32 %v743, %v871
        %v902 = vadd.f32 %v746, %v874
        %v903 = vadd.f32 %v751, %v879
        %v904 = vadd.f32 %v754, %v882
        %v905 = vadd.f32 %v759, %v887
        %v906 = vadd.f32 %v762, %v890
        %v907 = vadd.f32 %v767, %v895
        %v908 = vadd.f32 %v770, %v898
        %v909 = vld [vmem:[%s1 + $0xc] sm:$0xf]
        %v911 = vunpack.c.l.b16 %v436
        %v912 = vpack.c.b16 %v451, %v449
        %v913 = vpack.c.b16 %v455, %v453
        %v914 = vpack.c.b16 %v459, %v457
        %v915 = vpack.c.b16 %v911, %v461
        %v917 = vsel %vm607, %v912, 0
        %v920 = vsel %vm607, %v913, 0
        %v923 = vsel %vm607, %v914, 0
        %v926 = vsel %vm607, %v915, 0
        %v929 = vsel %vm620, %v909, 0
        %931 = vmatprep.subr.bf16.mxu0 0
        %932 = vmatpush1.bf16.msra.mxu0 %v929
        %933 = vmatprep.subr.bf16.mxu0 0
        %934 = vmatpush1.bf16.msra.mxu0 0
        %935 = vmatprep.subr.bf16.mxu0 0
        %936 = vmatpush1.bf16.msra.mxu0 0
        %937 = vmatprep.subr.bf16.mxu0 0
        %938 = vmatpush1.bf16.msra.mxu0 0
        %939 = vmatprep.subr.bf16.mxu0 0
        %940 = vmatpush1.bf16.msra.mxu0 0
        %941 = vmatprep.subr.bf16.mxu0 0
        %942 = vmatpush1.bf16.msra.mxu0 0
        %943 = vmatprep.subr.bf16.mxu0 0
        %944 = vmatpush1.bf16.msra.mxu0 0
        %945 = vmatprep.subr.bf16.mxu0 0
        %946 = vmatpush1.bf16.msra.mxu0 0
        %947 = vmatprep.subr.bf16.mxu0 0
        %948 = vmatpush1.bf16.msra.mxu0 0
        %949 = vmatprep.subr.bf16.mxu0 0
        %950 = vmatpush1.bf16.msra.mxu0 0
        %951 = vmatprep.subr.bf16.mxu0 0
        %952 = vmatpush1.bf16.msra.mxu0 0
        %953 = vmatprep.subr.bf16.mxu0 0
        %954 = vmatpush1.bf16.msra.mxu0 0
        %955 = vmatprep.subr.bf16.mxu0 0
        %956 = vmatpush1.bf16.msra.mxu0 0
        %957 = vmatprep.subr.bf16.mxu0 0
        %958 = vmatpush1.bf16.msra.mxu0 0
        %959 = vmatprep.subr.bf16.mxu0 0
        %960 = vmatpush1.bf16.msra.mxu0 0
        %961 = vmatprep.subr.bf16.mxu0 0
        %962 = vmatpush1.bf16.msra.mxu0 0
        %963 = vmatprep.mubr.bf16.mxu0 0
        %964 = vmatmul.mubr.bf16.gmra.mrb[0].mxu0 %v917
        %v965 = vpop.f32.mrb[0].mxu0
        %v966 = vadd.f32 0.0, %v965
        %v967 = vpop.f32.mrb[0].mxu0
        %v968 = vpop.f32.mrb[0].mxu0
        %v969 = vadd.f32 0.0, %v968
        %v970 = vpop.f32.mrb[0].mxu0
        %971 = vmatprep.mubr.bf16.mxu0 0
        %972 = vmatmul.mubr.bf16.gmra.mrb[0].mxu0 %v920
        %v973 = vpop.f32.mrb[0].mxu0
        %v974 = vadd.f32 0.0, %v973
        %v975 = vpop.f32.mrb[0].mxu0
        %v976 = vpop.f32.mrb[0].mxu0
        %v977 = vadd.f32 0.0, %v976
        %v978 = vpop.f32.mrb[0].mxu0
        %979 = vmatprep.mubr.bf16.mxu0 0
        %980 = vmatmul.mubr.bf16.gmra.mrb[0].mxu0 %v923
        %v981 = vpop.f32.mrb[0].mxu0
        %v982 = vadd.f32 0.0, %v981
        %v983 = vpop.f32.mrb[0].mxu0
        %v984 = vpop.f32.mrb[0].mxu0
        %v985 = vadd.f32 0.0, %v984
        %v986 = vpop.f32.mrb[0].mxu0
        %987 = vmatprep.mubr.bf16.mxu0 0
        %988 = vmatmul.mubr.bf16.gmra.mrb[0].mxu0 %v926
        %v989 = vpop.f32.mrb[0].mxu0
        %v990 = vadd.f32 0.0, %v989
        %v991 = vpop.f32.mrb[0].mxu0
        %v992 = vpop.f32.mrb[0].mxu0
        %v993 = vadd.f32 0.0, %v992
        %v994 = vpop.f32.mrb[0].mxu0
        %995 = vdwg.mxu0
        %v996 = vadd.f32 %v901, %v966
        %v997 = vadd.f32 %v902, %v969
        %v998 = vadd.f32 %v903, %v974
        %v999 = vadd.f32 %v904, %v977
        %v1000 = vadd.f32 %v905, %v982
        %v1001 = vadd.f32 %v906, %v985
        %v1002 = vadd.f32 %v907, %v990
        %v1003 = vadd.f32 %v908, %v993
        %v1004 = vunpack.c.h.b16 %v436
        %v1005 = vpack.c.b16 %v911, %v911
        %v1006 = vpack.c.b16 %v1004, %v1004
        %v1008 = vshrl.u32 %v1005, 16
        %v1010 = vrot.slane %v1008, 4
        %v1011 = vshll.u32 %v1005, 16
        %v1013 = vrot.slane %v1011, 5
        %v1014 = vor.u32 %v1010, %v1013
        %v1015 = vrot.slane %v1014, 4
        %v1017 = vshll.u32 %v1006, 16
        %v1019 = vrot.slane %v1017, 5
        %v1020 = vsel %vm481, %v1015, %v1019
        %v1021 = vld [vmem:[%s1 + $0x10] sm:$0xf]
        %v1022 = vunpack.c.l.b16 %v1020
        %v1023 = vpack.c.b16 %v597, %v596
        %v1024 = vpack.c.b16 %v599, %v598
        %v1025 = vpack.c.b16 %v601, %v600
        %v1026 = vpack.c.b16 %v1022, %v602
        %v1028 = vsel %vm607, %v1023, 0
        %v1031 = vsel %vm607, %v1024, 0
        %v1034 = vsel %vm607, %v1025, 0
        %v1037 = vsel %vm607, %v1026, 0
        %v1040 = vsel %vm620, %v1021, 0
        %1042 = vmatprep.subr.bf16.mxu0 0
        %1043 = vmatpush1.bf16.msra.mxu0 %v1040
        %1044 = vmatprep.subr.bf16.mxu0 0
        %1045 = vmatpush1.bf16.msra.mxu0 0
        %1046 = vmatprep.subr.bf16.mxu0 0
        %1047 = vmatpush1.bf16.msra.mxu0 0
        %1048 = vmatprep.subr.bf16.mxu0 0
        %1049 = vmatpush1.bf16.msra.mxu0 0
        %1050 = vmatprep.subr.bf16.mxu0 0
        %1051 = vmatpush1.bf16.msra.mxu0 0
        %1052 = vmatprep.subr.bf16.mxu0 0
        %1053 = vmatpush1.bf16.msra.mxu0 0
        %1054 = vmatprep.subr.bf16.mxu0 0
        %1055 = vmatpush1.bf16.msra.mxu0 0
        %1056 = vmatprep.subr.bf16.mxu0 0
        %1057 = vmatpush1.bf16.msra.mxu0 0
        %1058 = vmatprep.subr.bf16.mxu0 0
        %1059 = vmatpush1.bf16.msra.mxu0 0
        %1060 = vmatprep.subr.bf16.mxu0 0
        %1061 = vmatpush1.bf16.msra.mxu0 0
        %1062 = vmatprep.subr.bf16.mxu0 0
        %1063 = vmatpush1.bf16.msra.mxu0 0
        %1064 = vmatprep.subr.bf16.mxu0 0
        %1065 = vmatpush1.bf16.msra.mxu0 0
        %1066 = vmatprep.subr.bf16.mxu0 0
        %1067 = vmatpush1.bf16.msra.mxu0 0
        %1068 = vmatprep.subr.bf16.mxu0 0
        %1069 = vmatpush1.bf16.msra.mxu0 0
        %1070 = vmatprep.subr.bf16.mxu0 0
        %1071 = vmatpush1.bf16.msra.mxu0 0
        %1072 = vmatprep.subr.bf16.mxu0 0
        %1073 = vmatpush1.bf16.msra.mxu0 0
        %1074 = vmatprep.mubr.bf16.mxu0 0
        %1075 = vmatmul.mubr.bf16.gmra.mrb[0].mxu0 %v1028
        %v1076 = vpop.f32.mrb[0].mxu0
        %v1077 = vadd.f32 0.0, %v1076
        %v1078 = vpop.f32.mrb[0].mxu0
        %v1079 = vpop.f32.mrb[0].mxu0
        %v1080 = vadd.f32 0.0, %v1079
        %v1081 = vpop.f32.mrb[0].mxu0
        %1082 = vmatprep.mubr.bf16.mxu0 0
        %1083 = vmatmul.mubr.bf16.gmra.mrb[0].mxu0 %v1031
        %v1084 = vpop.f32.mrb[0].mxu0
        %v1085 = vadd.f32 0.0, %v1084
        %v1086 = vpop.f32.mrb[0].mxu0
        %v1087 = vpop.f32.mrb[0].mxu0
        %v1088 = vadd.f32 0.0, %v1087
        %v1089 = vpop.f32.mrb[0].mxu0
        %1090 = vmatprep.mubr.bf16.mxu0 0
        %1091 = vmatmul.mubr.bf16.gmra.mrb[0].mxu0 %v1034
        %v1092 = vpop.f32.mrb[0].mxu0
        %v1093 = vadd.f32 0.0, %v1092
        %v1094 = vpop.f32.mrb[0].mxu0
        %v1095 = vpop.f32.mrb[0].mxu0
        %v1096 = vadd.f32 0.0, %v1095
        %v1097 = vpop.f32.mrb[0].mxu0
        %1098 = vmatprep.mubr.bf16.mxu0 0
        %1099 = vmatmul.mubr.bf16.gmra.mrb[0].mxu0 %v1037
        %v1100 = vpop.f32.mrb[0].mxu0
        %v1101 = vadd.f32 0.0, %v1100
        %v1102 = vpop.f32.mrb[0].mxu0
        %v1103 = vpop.f32.mrb[0].mxu0
        %v1104 = vadd.f32 0.0, %v1103
        %v1105 = vpop.f32.mrb[0].mxu0
        %1106 = vdwg.mxu0
        %v1107 = vadd.f32 %v996, %v1077
        %v1108 = vadd.f32 %v997, %v1080
        %v1109 = vadd.f32 %v998, %v1085
        %v1110 = vadd.f32 %v999, %v1088
        %v1111 = vadd.f32 %v1000, %v1093
        %v1112 = vadd.f32 %v1001, %v1096
        %v1113 = vadd.f32 %v1002, %v1101
        %v1114 = vadd.f32 %v1003, %v1104
        %v1115 = vrot.slane %v1005, 5
        %v1116 = vrot.slane %v1115, 4
        %v1117 = vrot.slane %v1006, 5
        %v1118 = vsel %vm775, %v1116, %v1117
        %v1119 = vld [vmem:[%s1 + $0x14] sm:$0xf]
        %v1120 = vunpack.c.l.b16 %v1118
        %v1121 = vpack.c.b16 %v811, %v810
        %v1122 = vpack.c.b16 %v813, %v812
        %v1123 = vpack.c.b16 %v815, %v814
        %v1124 = vpack.c.b16 %v1120, %v816
        %v1126 = vsel %vm607, %v1121, 0
        %v1129 = vsel %vm607, %v1122, 0
        %v1132 = vsel %vm607, %v1123, 0
        %v1135 = vsel %vm607, %v1124, 0
        %v1138 = vsel %vm620, %v1119, 0
        %1140 = vmatprep.subr.bf16.mxu0 0
        %1141 = vmatpush1.bf16.msra.mxu0 %v1138
        %1142 = vmatprep.subr.bf16.mxu0 0
        %1143 = vmatpush1.bf16.msra.mxu0 0
        %1144 = vmatprep.subr.bf16.mxu0 0
        %1145 = vmatpush1.bf16.msra.mxu0 0
        %1146 = vmatprep.subr.bf16.mxu0 0
        %1147 = vmatpush1.bf16.msra.mxu0 0
        %1148 = vmatprep.subr.bf16.mxu0 0
        %1149 = vmatpush1.bf16.msra.mxu0 0
        %1150 = vmatprep.subr.bf16.mxu0 0
        %1151 = vmatpush1.bf16.msra.mxu0 0
        %1152 = vmatprep.subr.bf16.mxu0 0
        %1153 = vmatpush1.bf16.msra.mxu0 0
        %1154 = vmatprep.subr.bf16.mxu0 0
        %1155 = vmatpush1.bf16.msra.mxu0 0
        %1156 = vmatprep.subr.bf16.mxu0 0
        %1157 = vmatpush1.bf16.msra.mxu0 0
        %1158 = vmatprep.subr.bf16.mxu0 0
        %1159 = vmatpush1.bf16.msra.mxu0 0
        %1160 = vmatprep.subr.bf16.mxu0 0
        %1161 = vmatpush1.bf16.msra.mxu0 0
        %1162 = vmatprep.subr.bf16.mxu0 0
        %1163 = vmatpush1.bf16.msra.mxu0 0
        %1164 = vmatprep.subr.bf16.mxu0 0
        %1165 = vmatpush1.bf16.msra.mxu0 0
        %1166 = vmatprep.subr.bf16.mxu0 0
        %1167 = vmatpush1.bf16.msra.mxu0 0
        %1168 = vmatprep.subr.bf16.mxu0 0
        %1169 = vmatpush1.bf16.msra.mxu0 0
        %1170 = vmatprep.subr.bf16.mxu0 0
        %1171 = vmatpush1.bf16.msra.mxu0 0
        %1172 = vmatprep.mubr.bf16.mxu0 0
        %1173 = vmatmul.mubr.bf16.gmra.mrb[0].mxu0 %v1126
        %v1174 = vpop.f32.mrb[0].mxu0
        %v1175 = vadd.f32 0.0, %v1174
        %v1176 = vpop.f32.mrb[0].mxu0
        %v1177 = vpop.f32.mrb[0].mxu0
        %v1178 = vadd.f32 0.0, %v1177
        %v1179 = vpop.f32.mrb[0].mxu0
        %1180 = vmatprep.mubr.bf16.mxu0 0
        %1181 = vmatmul.mubr.bf16.gmra.mrb[0].mxu0 %v1129
        %v1182 = vpop.f32.mrb[0].mxu0
        %v1183 = vadd.f32 0.0, %v1182
        %v1184 = vpop.f32.mrb[0].mxu0
        %v1185 = vpop.f32.mrb[0].mxu0
        %v1186 = vadd.f32 0.0, %v1185
        %v1187 = vpop.f32.mrb[0].mxu0
        %1188 = vmatprep.mubr.bf16.mxu0 0
        %1189 = vmatmul.mubr.bf16.gmra.mrb[0].mxu0 %v1132
        %v1190 = vpop.f32.mrb[0].mxu0
        %v1191 = vadd.f32 0.0, %v1190
        %v1192 = vpop.f32.mrb[0].mxu0
        %v1193 = vpop.f32.mrb[0].mxu0
        %v1194 = vadd.f32 0.0, %v1193
        %v1195 = vpop.f32.mrb[0].mxu0
        %1196 = vmatprep.mubr.bf16.mxu0 0
        %1197 = vmatmul.mubr.bf16.gmra.mrb[0].mxu0 %v1135
        %v1198 = vpop.f32.mrb[0].mxu0
        %v1199 = vadd.f32 0.0, %v1198
        %v1200 = vpop.f32.mrb[0].mxu0
        %v1201 = vpop.f32.mrb[0].mxu0
        %v1202 = vadd.f32 0.0, %v1201
        %v1203 = vpop.f32.mrb[0].mxu0
        %1204 = vdwg.mxu0
        %v1205 = vadd.f32 %v1107, %v1175
        %v1206 = vadd.f32 %v1108, %v1178
        %v1207 = vadd.f32 %v1109, %v1183
        %v1208 = vadd.f32 %v1110, %v1186
        %v1209 = vadd.f32 %v1111, %v1191
        %v1210 = vadd.f32 %v1112, %v1194
        %v1211 = vadd.f32 %v1113, %v1199
        %v1212 = vadd.f32 %v1114, %v1202
        %v1213 = vld [vmem:[%s1 + $0x18] sm:$0xf]
        %v1215 = vunpack.c.l.b16 %v437
        %v1216 = vpack.c.b16 %v1215, %v911
        %v1218 = vsel %vm607, %v1216, 0
        %v1221 = vsel %vm620, %v1213, 0
        %1223 = vmatprep.subr.bf16.mxu0 0
        %1224 = vmatpush1.bf16.msra.mxu0 %v1221
        %1225 = vmatprep.subr.bf16.mxu0 0
        %1226 = vmatpush1.bf16.msra.mxu0 0
        %1227 = vmatprep.subr.bf16.mxu0 0
        %1228 = vmatpush1.bf16.msra.mxu0 0
        %1229 = vmatprep.subr.bf16.mxu0 0
        %1230 = vmatpush1.bf16.msra.mxu0 0
        %1231 = vmatprep.subr.bf16.mxu0 0
        %1232 = vmatpush1.bf16.msra.mxu0 0
        %1233 = vmatprep.subr.bf16.mxu0 0
        %1234 = vmatpush1.bf16.msra.mxu0 0
        %1235 = vmatprep.subr.bf16.mxu0 0
        %1236 = vmatpush1.bf16.msra.mxu0 0
        %1237 = vmatprep.subr.bf16.mxu0 0
        %1238 = vmatpush1.bf16.msra.mxu0 0
        %1239 = vmatprep.subr.bf16.mxu0 0
        %1240 = vmatpush1.bf16.msra.mxu0 0
        %1241 = vmatprep.subr.bf16.mxu0 0
        %1242 = vmatpush1.bf16.msra.mxu0 0
        %1243 = vmatprep.subr.bf16.mxu0 0
        %1244 = vmatpush1.bf16.msra.mxu0 0
        %1245 = vmatprep.subr.bf16.mxu0 0
        %1246 = vmatpush1.bf16.msra.mxu0 0
        %1247 = vmatprep.subr.bf16.mxu0 0
        %1248 = vmatpush1.bf16.msra.mxu0 0
        %1249 = vmatprep.subr.bf16.mxu0 0
        %1250 = vmatpush1.bf16.msra.mxu0 0
        %1251 = vmatprep.subr.bf16.mxu0 0
        %1252 = vmatpush1.bf16.msra.mxu0 0
        %1253 = vmatprep.subr.bf16.mxu0 0
        %1254 = vmatpush1.bf16.msra.mxu0 0
        %1255 = vmatprep.mubr.bf16.mxu0 0
        %1256 = vmatmul.mubr.bf16.gmra.mrb[0].mxu0 %v697
        %v1257 = vpop.f32.mrb[0].mxu0
        %v1258 = vadd.f32 0.0, %v1257
        %v1259 = vpop.f32.mrb[0].mxu0
        %v1260 = vpop.f32.mrb[0].mxu0
        %v1261 = vadd.f32 0.0, %v1260
        %v1262 = vpop.f32.mrb[0].mxu0
        %1263 = vmatprep.mubr.bf16.mxu0 0
        %1264 = vmatmul.mubr.bf16.gmra.mrb[0].mxu0 %v700
        %v1265 = vpop.f32.mrb[0].mxu0
        %v1266 = vadd.f32 0.0, %v1265
        %v1267 = vpop.f32.mrb[0].mxu0
        %v1268 = vpop.f32.mrb[0].mxu0
        %v1269 = vadd.f32 0.0, %v1268
        %v1270 = vpop.f32.mrb[0].mxu0
        %1271 = vmatprep.mubr.bf16.mxu0 0
        %1272 = vmatmul.mubr.bf16.gmra.mrb[0].mxu0 %v703
        %v1273 = vpop.f32.mrb[0].mxu0
        %v1274 = vadd.f32 0.0, %v1273
        %v1275 = vpop.f32.mrb[0].mxu0
        %v1276 = vpop.f32.mrb[0].mxu0
        %v1277 = vadd.f32 0.0, %v1276
        %v1278 = vpop.f32.mrb[0].mxu0
        %1279 = vmatprep.mubr.bf16.mxu0 0
        %1280 = vmatmul.mubr.bf16.gmra.mrb[0].mxu0 %v1218
        %v1281 = vpop.f32.mrb[0].mxu0
        %v1282 = vadd.f32 0.0, %v1281
        %v1283 = vpop.f32.mrb[0].mxu0
        %v1284 = vpop.f32.mrb[0].mxu0
        %v1285 = vadd.f32 0.0, %v1284
        %v1286 = vpop.f32.mrb[0].mxu0
        %1287 = vdwg.mxu0
        %v1288 = vadd.f32 %v1205, %v1258
        %v1289 = vadd.f32 %v1206, %v1261
        %v1290 = vadd.f32 %v1207, %v1266
        %v1291 = vadd.f32 %v1208, %v1269
        %v1292 = vadd.f32 %v1209, %v1274
        %v1293 = vadd.f32 %v1210, %v1277
        %v1294 = vadd.f32 %v1211, %v1282
        %v1295 = vadd.f32 %v1212, %v1285
        %v1296 = vunpack.c.h.b16 %v437
        %v1297 = vpack.c.b16 %v1215, %v1215
        %v1298 = vpack.c.b16 %v1296, %v1296
        %v1300 = vshrl.u32 %v1297, 16
        %v1302 = vrot.slane %v1300, 4
        %v1303 = vshll.u32 %v1297, 16
        %v1305 = vrot.slane %v1303, 5
        %v1306 = vor.u32 %v1302, %v1305
        %v1307 = vrot.slane %v1306, 4
        %v1309 = vshll.u32 %v1298, 16
        %v1311 = vrot.slane %v1309, 5
        %v1312 = vsel %vm481, %v1307, %v1311
        %v1313 = vld [vmem:[%s1 + $0x1c] sm:$0xf]
        %v1314 = vunpack.c.l.b16 %v1312
        %v1315 = vpack.c.b16 %v1314, %v1022
        %v1317 = vsel %vm607, %v1315, 0
        %v1320 = vsel %vm620, %v1313, 0
        %1322 = vmatprep.subr.bf16.mxu0 0
        %1323 = vmatpush1.bf16.msra.mxu0 %v1320
        %1324 = vmatprep.subr.bf16.mxu0 0
        %1325 = vmatpush1.bf16.msra.mxu0 0
        %1326 = vmatprep.subr.bf16.mxu0 0
        %1327 = vmatpush1.bf16.msra.mxu0 0
        %1328 = vmatprep.subr.bf16.mxu0 0
        %1329 = vmatpush1.bf16.msra.mxu0 0
        %1330 = vmatprep.subr.bf16.mxu0 0
        %1331 = vmatpush1.bf16.msra.mxu0 0
        %1332 = vmatprep.subr.bf16.mxu0 0
        %1333 = vmatpush1.bf16.msra.mxu0 0
        %1334 = vmatprep.subr.bf16.mxu0 0
        %1335 = vmatpush1.bf16.msra.mxu0 0
        %1336 = vmatprep.subr.bf16.mxu0 0
        %1337 = vmatpush1.bf16.msra.mxu0 0
        %1338 = vmatprep.subr.bf16.mxu0 0
        %1339 = vmatpush1.bf16.msra.mxu0 0
        %1340 = vmatprep.subr.bf16.mxu0 0
        %1341 = vmatpush1.bf16.msra.mxu0 0
        %1342 = vmatprep.subr.bf16.mxu0 0
        %1343 = vmatpush1.bf16.msra.mxu0 0
        %1344 = vmatprep.subr.bf16.mxu0 0
        %1345 = vmatpush1.bf16.msra.mxu0 0
        %1346 = vmatprep.subr.bf16.mxu0 0
        %1347 = vmatpush1.bf16.msra.mxu0 0
        %1348 = vmatprep.subr.bf16.mxu0 0
        %1349 = vmatpush1.bf16.msra.mxu0 0
        %1350 = vmatprep.subr.bf16.mxu0 0
        %1351 = vmatpush1.bf16.msra.mxu0 0
        %1352 = vmatprep.subr.bf16.mxu0 0
        %1353 = vmatpush1.bf16.msra.mxu0 0
        %1354 = vmatprep.mubr.bf16.mxu0 0
        %1355 = vmatmul.mubr.bf16.gmra.mrb[0].mxu0 %v612
        %v1356 = vpop.f32.mrb[0].mxu0
        %v1357 = vadd.f32 0.0, %v1356
        %v1358 = vpop.f32.mrb[0].mxu0
        %v1359 = vpop.f32.mrb[0].mxu0
        %v1360 = vadd.f32 0.0, %v1359
        %v1361 = vpop.f32.mrb[0].mxu0
        %1362 = vmatprep.mubr.bf16.mxu0 0
        %1363 = vmatmul.mubr.bf16.gmra.mrb[0].mxu0 %v615
        %v1364 = vpop.f32.mrb[0].mxu0
        %v1365 = vadd.f32 0.0, %v1364
        %v1366 = vpop.f32.mrb[0].mxu0
        %v1367 = vpop.f32.mrb[0].mxu0
        %v1368 = vadd.f32 0.0, %v1367
        %v1369 = vpop.f32.mrb[0].mxu0
        %1370 = vmatprep.mubr.bf16.mxu0 0
        %1371 = vmatmul.mubr.bf16.gmra.mrb[0].mxu0 %v618
        %v1372 = vpop.f32.mrb[0].mxu0
        %v1373 = vadd.f32 0.0, %v1372
        %v1374 = vpop.f32.mrb[0].mxu0
        %v1375 = vpop.f32.mrb[0].mxu0
        %v1376 = vadd.f32 0.0, %v1375
        %v1377 = vpop.f32.mrb[0].mxu0
        %1378 = vmatprep.mubr.bf16.mxu0 0
        %1379 = vmatmul.mubr.bf16.gmra.mrb[0].mxu0 %v1317
        %v1380 = vpop.f32.mrb[0].mxu0
        %v1381 = vadd.f32 0.0, %v1380
        %v1382 = vpop.f32.mrb[0].mxu0
        %v1383 = vpop.f32.mrb[0].mxu0
        %v1384 = vadd.f32 0.0, %v1383
        %v1385 = vpop.f32.mrb[0].mxu0
        %1386 = vdwg.mxu0
        %v1387 = vadd.f32 %v1288, %v1357
        %v1388 = vadd.f32 %v1289, %v1360
        %v1389 = vadd.f32 %v1290, %v1365
        %v1390 = vadd.f32 %v1291, %v1368
        %v1391 = vadd.f32 %v1292, %v1373
        %v1392 = vadd.f32 %v1293, %v1376
        %v1393 = vadd.f32 %v1294, %v1381
        %v1394 = vadd.f32 %v1295, %v1384
        %v1395 = vrot.slane %v1297, 5
        %v1396 = vrot.slane %v1395, 4
        %v1397 = vrot.slane %v1298, 5
        %v1398 = vsel %vm775, %v1396, %v1397
        %v1399 = vld [vmem:[%s1 + $0x20] sm:$0xf]
        %v1400 = vunpack.c.l.b16 %v1398
        %v1401 = vpack.c.b16 %v1400, %v1120
        %v1403 = vsel %vm607, %v1401, 0
        %v1406 = vsel %vm620, %v1399, 0
        %1408 = vmatprep.subr.bf16.mxu0 0
        %1409 = vmatpush1.bf16.msra.mxu0 %v1406
        %1410 = vmatprep.subr.bf16.mxu0 0
        %1411 = vmatpush1.bf16.msra.mxu0 0
        %1412 = vmatprep.subr.bf16.mxu0 0
        %1413 = vmatpush1.bf16.msra.mxu0 0
        %1414 = vmatprep.subr.bf16.mxu0 0
        %1415 = vmatpush1.bf16.msra.mxu0 0
        %1416 = vmatprep.subr.bf16.mxu0 0
        %1417 = vmatpush1.bf16.msra.mxu0 0
        %1418 = vmatprep.subr.bf16.mxu0 0
        %1419 = vmatpush1.bf16.msra.mxu0 0
        %1420 = vmatprep.subr.bf16.mxu0 0
        %1421 = vmatpush1.bf16.msra.mxu0 0
        %1422 = vmatprep.subr.bf16.mxu0 0
        %1423 = vmatpush1.bf16.msra.mxu0 0
        %1424 = vmatprep.subr.bf16.mxu0 0
        %1425 = vmatpush1.bf16.msra.mxu0 0
        %1426 = vmatprep.subr.bf16.mxu0 0
        %1427 = vmatpush1.bf16.msra.mxu0 0
        %1428 = vmatprep.subr.bf16.mxu0 0
        %1429 = vmatpush1.bf16.msra.mxu0 0
        %1430 = vmatprep.subr.bf16.mxu0 0
        %1431 = vmatpush1.bf16.msra.mxu0 0
        %1432 = vmatprep.subr.bf16.mxu0 0
        %1433 = vmatpush1.bf16.msra.mxu0 0
        %1434 = vmatprep.subr.bf16.mxu0 0
        %1435 = vmatpush1.bf16.msra.mxu0 0
        %1436 = vmatprep.subr.bf16.mxu0 0
        %1437 = vmatpush1.bf16.msra.mxu0 0
        %1438 = vmatprep.subr.bf16.mxu0 0
        %1439 = vmatpush1.bf16.msra.mxu0 0
        %1440 = vmatprep.mubr.bf16.mxu0 0
        %1441 = vmatmul.mubr.bf16.gmra.mrb[0].mxu0 %v825
        %v1442 = vpop.f32.mrb[0].mxu0
        %v1443 = vadd.f32 0.0, %v1442
        %v1444 = vpop.f32.mrb[0].mxu0
        %v1445 = vpop.f32.mrb[0].mxu0
        %v1446 = vadd.f32 0.0, %v1445
        %v1447 = vpop.f32.mrb[0].mxu0
        %1448 = vmatprep.mubr.bf16.mxu0 0
        %1449 = vmatmul.mubr.bf16.gmra.mrb[0].mxu0 %v828
        %v1450 = vpop.f32.mrb[0].mxu0
        %v1451 = vadd.f32 0.0, %v1450
        %v1452 = vpop.f32.mrb[0].mxu0
        %v1453 = vpop.f32.mrb[0].mxu0
        %v1454 = vadd.f32 0.0, %v1453
        %v1455 = vpop.f32.mrb[0].mxu0
        %1456 = vmatprep.mubr.bf16.mxu0 0
        %1457 = vmatmul.mubr.bf16.gmra.mrb[0].mxu0 %v831
        %v1458 = vpop.f32.mrb[0].mxu0
        %v1459 = vadd.f32 0.0, %v1458
        %v1460 = vpop.f32.mrb[0].mxu0
        %v1461 = vpop.f32.mrb[0].mxu0
        %v1462 = vadd.f32 0.0, %v1461
        %v1463 = vpop.f32.mrb[0].mxu0
        %1464 = vmatprep.mubr.bf16.mxu0 0
        %1465 = vmatmul.mubr.bf16.gmra.mrb[0].mxu0 %v1403
        %v1466 = vpop.f32.mrb[0].mxu0
        %v1467 = vadd.f32 0.0, %v1466
        %v1468 = vpop.f32.mrb[0].mxu0
        %v1469 = vpop.f32.mrb[0].mxu0
        %v1470 = vadd.f32 0.0, %v1469
        %v1471 = vpop.f32.mrb[0].mxu0
        %1472 = vdwg.mxu0
        %v1473 = vadd.f32 %v1387, %v1443
        %v1474 = vadd.f32 %v1388, %v1446
        %v1475 = vadd.f32 %v1389, %v1451
        %v1476 = vadd.f32 %v1390, %v1454
        %v1477 = vadd.f32 %v1391, %v1459
        %v1478 = vadd.f32 %v1392, %v1462
        %v1479 = vadd.f32 %v1393, %v1467
        %v1480 = vadd.f32 %v1394, %v1470
        %v1481 = vld [vmem:[%s2] sm:$0x1]
        %v1483 = vlaneseq
        %v1484 = vshrl.u32 %v1483, 7
        %v1485 = vsub.s32 0, %v1484
        %v1486 = vrot.slane %v1481, %v1485
        %v1488 = vadd.f32 %v1473, %v1486
        %v1489 = vadd.f32 %v1474, %v1486
        %v1490 = vadd.f32 %v1475, %v1486
        %v1491 = vadd.f32 %v1476, %v1486
        %v1492 = vadd.f32 %v1477, %v1486
        %v1493 = vadd.f32 %v1478, %v1486
        %v1494 = vadd.f32 %v1479, %v1486
        %v1495 = vadd.f32 %v1480, %v1486
        %v1496 = vadd.f32 %v1488, %v1489
        %v1497 = vadd.f32 %v1496, %v1490
        %v1498 = vadd.f32 %v1497, %v1491
        %v1499 = vadd.f32 %v1498, %v1492
        %v1500 = vadd.f32 %v1499, %v1493
        %v1501 = vadd.f32 %v1500, %v1494
        %v1502 = vadd.f32 %v1501, %v1495
        %v1503 = vrot.slane %v1502, 4
        %v1504 = vadd.f32 %v1502, %v1503
        %v1505 = vrot.slane %v1504, 2
        %v1506 = vadd.f32 %v1504, %v1505
        %v1507 = vrot.slane %v1506, 1
        %v1508 = vadd.f32 %v1506, %v1507
        %1509 = vst [vmem:[%s201] sm:$0x1] %v1508
        %v1510 = vmul.f32 %v1488, %v1488
        %v1511 = vmul.f32 %v1489, %v1489
        %v1512 = vmul.f32 %v1490, %v1490
        %v1513 = vmul.f32 %v1491, %v1491
        %v1514 = vmul.f32 %v1492, %v1492
        %v1515 = vmul.f32 %v1493, %v1493
        %v1516 = vmul.f32 %v1494, %v1494
        %v1517 = vmul.f32 %v1495, %v1495
        %v1518 = vadd.f32 %v1510, %v1511
        %v1519 = vadd.f32 %v1518, %v1512
        %v1520 = vadd.f32 %v1519, %v1513
        %v1521 = vadd.f32 %v1520, %v1514
        %v1522 = vadd.f32 %v1521, %v1515
        %v1523 = vadd.f32 %v1522, %v1516
        %v1524 = vadd.f32 %v1523, %v1517
        %v1525 = vrot.slane %v1524, 4
        %v1526 = vadd.f32 %v1524, %v1525
        %v1527 = vrot.slane %v1526, 2
        %v1528 = vadd.f32 %v1526, %v1527
        %v1529 = vrot.slane %v1528, 1
        %v1530 = vadd.f32 %v1528, %v1529
        %1531 = vst [vmem:[%s201 + $0x1] sm:$0x1] %v1530
        %v1532 = vpack.c.bf16 %v1489, %v1488
        %v1533 = vpack.c.bf16 %v1491, %v1490
        %v1534 = vpack.c.bf16 %v1493, %v1492
        %v1535 = vpack.c.bf16 %v1495, %v1494
        %v1540 = vunpack.c.l.b16 %v1532
        %v1541 = vunpack.c.h.b16 %v1532
        %v1542 = vunpack.c.l.b16 %v1533
        %v1543 = vunpack.c.h.b16 %v1533
        %v1544 = vunpack.c.l.b16 %v1534
        %v1545 = vunpack.c.h.b16 %v1534
        %v1546 = vunpack.c.l.b16 %v1535
        %v1547 = vunpack.c.h.b16 %v1535
        %v1548 = vpack.c.b16 %v1540, %v1540
        %v1549 = vpack.c.b16 %v1541, %v1541
        %v1550 = vpack.c.b16 %v1542, %v1542
        %v1551 = vpack.c.b16 %v1543, %v1543
        %v1552 = vpack.c.b16 %v1544, %v1544
        %v1553 = vpack.c.b16 %v1545, %v1545
        %v1554 = vpack.c.b16 %v1546, %v1546
        %v1555 = vpack.c.b16 %v1547, %v1547
        %vm1564 = vcmask 125952
        %1565 = vst.msk [vmem:[%s194] sm:$0xf] %vm1564, %v1548
        %1566 = vst.msk [vmem:[%s194 + $0x4] sm:$0xf] %vm1564, %v1549
        %1567 = vst.msk [vmem:[%s194 + $0x8] sm:$0xf] %vm1564, %v1550
        %1568 = vst.msk [vmem:[%s194 + $0xc] sm:$0xf] %vm1564, %v1551
        %1569 = vst.msk [vmem:[%s194 + $0x10] sm:$0xf] %vm1564, %v1552
        %1570 = vst.msk [vmem:[%s194 + $0x14] sm:$0xf] %vm1564, %v1553
        %1571 = vst.msk [vmem:[%s194 + $0x18] sm:$0xf] %vm1564, %v1554
        %1572 = vst.msk [vmem:[%s194 + $0x1c] sm:$0xf] %vm1564, %v1555
        %s1573 = sand.u32 %s98, 1
        %s1574 = scalar_lea.sflag [#allocation3], %s1573
        %s1575 = sand.u32 %s98, 1
        %s1576 = smul.addr %s1575, 32
        %s1577 = scalar_lea.vmem [#allocation2], %s1576
        %s1578 = sand.u32 %s124, 1
        %s1579 = scalar_lea.sflag [#allocation5], %s1578
        %s1580 = sand.u32 %s124, 1
        %s1581 = smul.addr %s1580, 2
        %s1582 = scalar_lea.vmem [#allocation4], %s1581
        // Predicated region
        $region33: #{tpu_custom_call.1} parent=31 // pred_check
          %p1583 = pneg %p108
        $region34: #{tpu_custom_call.1} parent=31 // pred_check_branch
          %1585 = sbr.rel (%p1583) target = $region36
        $region35: #{tpu_custom_call.1} parent=31 // pred_region
          %s1587 = ssub.s32 512, 512
          %1588 = vsyncadd %s1574, %s1587
          %s1589 = smul.addr %s22, 8
          %s1590 = smul.addr %s1589, 64
          %s1591 = scalar_lea.hbm %s3, %s1590
          %s1592 = sshll.u32 %s1577, 4
          %s1593 = int_to_ptr.vmem [resolvable:$true] %s1592
          %1598 = dma.vmem_to_hbm [thread:$0]  %s1593, 512, %s1591, %s1574, 64, 64, 4
        $region36: #{tpu_custom_call.1} parent=31 // pred_fallthru
          _
        // Predicated region
        $region37: #{tpu_custom_call.1} parent=31 // pred_check
          %p1599 = pneg %p134
        $region38: #{tpu_custom_call.1} parent=31 // pred_check_branch
          %1601 = sbr.rel (%p1599) target = $region40
        $region39: #{tpu_custom_call.1} parent=31 // pred_region
          %s1603 = ssub.s32 32, 32
          %1604 = vsyncadd %s1579, %s1603
          %s1605 = smul.addr %s22, 32
          %s1606 = scalar_lea.hbm %s4, %s1605
          %s1608 = sshll.u32 %s1582, 4
          %s1609 = int_to_ptr.vmem [resolvable:$true] %s1608
          %1611 = dma.vmem_to_hbm [thread:$0]  %s1609, 32, %s1606, %s1579
        $region40: #{tpu_custom_call.1} parent=31 // pred_fallthru
          _
      $region32: #{tpu_custom_call.1} parent=5 // pred_fallthru
        _
      %p1612 = scmp.le.s32.totalorder 2, %s17
      // Predicated region
      $region41: #{tpu_custom_call.1} parent=5 // pred_check
        %p1613 = pneg %p1612
      $region42: #{tpu_custom_call.1} parent=5 // pred_check_branch
        %1615 = sbr.rel (%p1613) target = $region44
      $region43: #{tpu_custom_call.1} parent=5 // pred_region
        %s1616 = ssub.s32 %s17, 2
        // Predicated region
        $region45: #{tpu_custom_call.1} parent=43 // pred_check
          %p1617 = pneg %p114
        $region46: #{tpu_custom_call.1} parent=43 // pred_check_branch
          %1619 = sbr.rel (%p1617) target = $region48
        $region47: #{tpu_custom_call.1} parent=43 // pred_region
          %s1620 = sand.u32 %s99, 1
          %s1621 = scalar_lea.sflag [#allocation3], %s1620
          %s1622 = sand.u32 %s99, 1
          %s1623 = smul.addr %s1622, 32
          %s1624 = scalar_lea.vmem [#allocation2], %s1623
          %1625 = dma.done %s1621, 512
        $region48: #{tpu_custom_call.1} parent=43 // pred_fallthru
          _
        // Predicated region
        $region49: #{tpu_custom_call.1} parent=43 // pred_check
          %p1626 = pneg %p140
        $region50: #{tpu_custom_call.1} parent=43 // pred_check_branch
          %1628 = sbr.rel (%p1626) target = $region52
        $region51: #{tpu_custom_call.1} parent=43 // pred_region
          %s1629 = sand.u32 %s125, 1
          %s1630 = scalar_lea.sflag [#allocation5], %s1629
          %s1631 = sand.u32 %s125, 1
          %s1632 = smul.addr %s1631, 2
          %s1633 = scalar_lea.vmem [#allocation4], %s1632
          %1634 = dma.done %s1630, 32
        $region52: #{tpu_custom_call.1} parent=43 // pred_fallthru
          _
      $region44: #{tpu_custom_call.1} parent=5 // pred_fallthru
        _
    $region6: #{tpu_custom_call.1} parent=1 // loop_footer
      %s21 = sadd.s32 1, %s17
    $region7: #{tpu_custom_call.1} parent=1 // loop_footer_branch
      %16 = sbr.rel target = $region3
    $region8: #{tpu_custom_call.1} parent=1 // loop_exit
      _
    %1635 = vsyncpa [#allocation3], 1
    %s1636 = scalar_lea.sflag [#allocation3], 1
    %1637 = vsyncpa %s1636, 1
    %1638 = vsyncpa [#allocation5], 1
    %s1639 = scalar_lea.sflag [#allocation5], 1
    %1640 = vsyncpa %s1639, 1

</llo_original>
